<compile_context>
chip_gen: v7x
topology: tpu7x:2x2x1
jax: 0.10.0
libtpu: 0.0.40
codegen_flags: <defaults>
</compile_context>

<pallas_src>
import jax
import jax.numpy as jnp
from jax.experimental import pallas as pl
from jax.experimental.pallas import tpu as pltpu


def _gcn_kernel(x_ref, a1_ref, b1_ref, a2_ref, o_ref):
    # x_ref : (Bt, S*N)   lane-dense tile of flattened inputs
    # a1_ref: (S*N, S*N)  kron(I_S, W1^T) + I   (conv1 + residual), resident
    # b1_ref: (1, S*N)    tiled conv1 bias (f32), resident
    # a2_ref: (S*N, S*N)  kron(W2^T, I_N)       (conv2), resident
    # o_ref : (Bt, S*N)
    x = x_ref[...]

    # conv1 + residual (identity folded into A1), bias, ReLU; f32 accumulation.
    h = jnp.dot(x, a1_ref[...], preferred_element_type=jnp.float32)
    h = jnp.maximum(h + b1_ref[...], 0.0)

    # conv2 as a second lane-dense MXU matmul, f32 accumulation.
    out = jnp.dot(h.astype(a2_ref.dtype), a2_ref[...],
                  preferred_element_type=jnp.float32)

    o_ref[...] = out.astype(o_ref.dtype)


def gcn_forward(x, w1, b1, w2, *, block_b=512, compute_dtype=None):
    """GCN forward.

    x : (B, S, N) with S = num_state, N = num_node (PyTorch (N, C, L) layout).
    w1: (N, N) conv1 weight (kernel_size-1 dim squeezed), b1: (N,) conv1 bias.
    w2: (S, S) conv2 weight (bias=False as in the module default).
    block_b: requested batch-tile size (multiple of 8 when B > block_b).
    compute_dtype: optional dtype for x and the lifted weights inside the
        kernel (e.g. jnp.bfloat16 on v6e/v7x to halve HBM traffic).
        Accumulation / bias / ReLU stay in f32; output keeps x.dtype.
    """
    B, S, N = x.shape
    SN = S * N
    out_dtype = jnp.dtype(x.dtype)
    cdt = jnp.dtype(compute_dtype) if compute_dtype is not None else out_dtype

    f32 = jnp.float32
    # Kronecker-lifted weights: the whole layer becomes two (Bt, SN)@(SN, SN)
    # matmuls on the contiguous (B, S*N) view of x. The W1 transpose and the
    # residual identity are folded in here, once, outside the grid loop.
    a1 = jnp.kron(jnp.eye(S, dtype=f32), w1.astype(f32).T) + jnp.eye(SN, dtype=f32)
    a2 = jnp.kron(w2.astype(f32).T, jnp.eye(N, dtype=f32))
    b1_full = jnp.tile(b1.astype(f32), S).reshape(1, SN)

    # Lifted weights must stay VMEM-resident; this module targets small S*N.
    assert SN <= 1024, "Kronecker-lifted GCN kernel expects small num_state*num_node"

    x_flat = x.reshape(B, SN).astype(cdt)   # contiguous reshape: free
    a1 = a1.astype(cdt)
    a2 = a2.astype(cdt)

    # Clamp the batch tile so double-buffered in/out tiles stay ~<= 8 MiB VMEM
    # (the two resident lifted weights add 2*SN^2*itemsize on top of this).
    row_bytes = SN * (cdt.itemsize + out_dtype.itemsize)
    max_bt = max(8, ((8 * 1024 * 1024) // (2 * row_bytes)) // 8 * 8)
    block_b = min(block_b, max_bt)

    if B <= block_b:
        bt = B
        b_pad = B
    else:
        assert block_b % 8 == 0, "block_b must be a multiple of 8 when tiling"
        bt = block_b
        b_pad = -(-B // bt) * bt
        if b_pad != B:
            x_flat = jnp.pad(x_flat, ((0, b_pad - B), (0, 0)))

    grid = (b_pad // bt,)

    out_flat = pl.pallas_call(
        _gcn_kernel,
        out_shape=jax.ShapeDtypeStruct((b_pad, SN), out_dtype),
        grid_spec=pltpu.PrefetchScalarGridSpec(
            num_scalar_prefetch=0,
            grid=grid,
            in_specs=[
                pl.BlockSpec((bt, SN), lambda i: (i, 0)),   # x batch tile
                pl.BlockSpec((SN, SN), lambda i: (0, 0)),   # A1 (resident)
                pl.BlockSpec((1, SN), lambda i: (0, 0)),    # bias (resident)
                pl.BlockSpec((SN, SN), lambda i: (0, 0)),   # A2 (resident)
            ],
            out_specs=pl.BlockSpec((bt, SN), lambda i: (i, 0)),
        ),
        compiler_params=pltpu.CompilerParams(
            dimension_semantics=("parallel",),   # batch tiles split across TCs
        ),
    )(x_flat, a1, b1_full, a2)

    return out_flat[:B].reshape(B, S, N)


def gcn_reference(x, w1, b1, w2):
    """Pure-JAX reference mirroring the PyTorch forward."""
    h = jnp.einsum("bsi,ni->bsn", x, w1) + b1[None, None, :]
    h = jnp.maximum(h + x, 0.0)
    return jnp.einsum("os,bsn->bon", w2, h)


if __name__ == "__main__":
    num_state, num_node = 32, 16
    B = 20

    key = jax.random.PRNGKey(0)
    kx, k1, kb, k2 = jax.random.split(key, 4)

    x = jax.random.normal(kx, (B, num_state, num_node), dtype=jnp.float32)
    # conv1: Conv1d(num_node, num_node, 1, bias=True) -> (N, N) weight, (N,) bias
    w1 = jax.random.normal(k1, (num_node, num_node), dtype=jnp.float32) * 0.1
    b1 = jax.random.normal(kb, (num_node,), dtype=jnp.float32) * 0.1
    # conv2: Conv1d(num_state, num_state, 1, bias=False) -> (S, S) weight
    w2 = jax.random.normal(k2, (num_state, num_state), dtype=jnp.float32) * 0.1

    ref = gcn_reference(x, w1, b1, w2)

    # f32 path, exercising multiple batch tiles + ragged tail (B=20, Bt=8 -> pad to 24).
    out = jax.block_until_ready(gcn_forward(x, w1, b1, w2, block_b=8))
    assert out.shape == (B, num_state, num_node)
    assert jnp.allclose(out, ref, atol=1e-3, rtol=1e-3), "f32 kernel mismatch vs reference"

    # Single-tile f32 path (default tiling).
    out_single = jax.block_until_ready(gcn_forward(x, w1, b1, w2))
    assert jnp.allclose(out_single, ref, atol=1e-3, rtol=1e-3), "single-tile mismatch vs reference"

    # bf16 input/weight path (v6e/v7x HBM-bandwidth optimization), f32 accumulation.
    out_bf16 = jax.block_until_ready(
        gcn_forward(x, w1, b1, w2, compute_dtype=jnp.bfloat16))
    assert out_bf16.shape == (B, num_state, num_node)
    assert jnp.allclose(out_bf16, ref, atol=5e-2, rtol=5e-2), "bf16 kernel mismatch vs reference"

    print("KERNEL_OK")
</pallas_src>

<mosaic_0001>
module attributes {stable_mosaic.version = 11 : i64} {
  func.func @_gcn_kernel(%arg0: i32, %arg1: memref<8x512xf32, #tpu.memory_space<vmem>>, %arg2: memref<512x512xf32, #tpu.memory_space<vmem>>, %arg3: memref<1x512xf32, #tpu.memory_space<vmem>>, %arg4: memref<512x512xf32, #tpu.memory_space<vmem>>, %arg5: memref<8x512xf32, #tpu.memory_space<vmem>>) attributes {dimension_semantics = [#tpu.dimension_semantics<parallel>], iteration_bounds = array<i64: 3>, scalar_prefetch = 0 : i64, scratch_operands = 0 : i64, tpu.core_type = #tpu.core_type<tc>, window_params = [{transform_indices = @transform_0, window_bounds = array<i64: 8, 512>}, {pipeline_mode = #tpu.pipeline_mode<synchronous>, transform_indices = @transform_1, window_bounds = array<i64: 512, 512>}, {pipeline_mode = #tpu.pipeline_mode<synchronous>, transform_indices = @transform_2, window_bounds = array<i64: 1, 512>}, {pipeline_mode = #tpu.pipeline_mode<synchronous>, transform_indices = @transform_3, window_bounds = array<i64: 512, 512>}, {transform_indices = @transform_4, window_bounds = array<i64: 8, 512>}]} {
    %c0 = arith.constant 0 : index
    %c0_0 = arith.constant 0 : index
    %0 = vector.load %arg1[%c0, %c0_0] : memref<8x512xf32, #tpu.memory_space<vmem>>, vector<8x512xf32>
    %c0_1 = arith.constant 0 : index
    %c0_2 = arith.constant 0 : index
    %1 = vector.load %arg2[%c0_1, %c0_2] : memref<512x512xf32, #tpu.memory_space<vmem>>, vector<512x512xf32>
    %cst = arith.constant dense<0.000000e+00> : vector<8x512xf32>
    %2 = tpu.matmul %0, %1, %cst {dimension_numbers = #tpu.dot_dimension_numbers<[1], [0], [0], [1], [0, 0, 1, 1], [], []>} : vector<8x512xf32>, vector<512x512xf32>, vector<8x512xf32> -> vector<8x512xf32>
    %c0_3 = arith.constant 0 : index
    %c0_4 = arith.constant 0 : index
    %3 = vector.load %arg3[%c0_3, %c0_4] : memref<1x512xf32, #tpu.memory_space<vmem>>, vector<1x512xf32>
    %4 = vector.broadcast %3 : vector<1x512xf32> to vector<8x512xf32>
    %5 = arith.addf %2, %4 : vector<8x512xf32>
    %cst_5 = arith.constant 0.000000e+00 : f32
    %6 = vector.broadcast %cst_5 : f32 to vector<8x512xf32>
    %7 = arith.maximumf %5, %6 : vector<8x512xf32>
    %c0_6 = arith.constant 0 : index
    %c0_7 = arith.constant 0 : index
    %8 = vector.load %arg4[%c0_6, %c0_7] : memref<512x512xf32, #tpu.memory_space<vmem>>, vector<512x512xf32>
    %cst_8 = arith.constant dense<0.000000e+00> : vector<8x512xf32>
    %9 = tpu.matmul %7, %8, %cst_8 {dimension_numbers = #tpu.dot_dimension_numbers<[1], [0], [0], [1], [0, 0, 1, 1], [], []>} : vector<8x512xf32>, vector<512x512xf32>, vector<8x512xf32> -> vector<8x512xf32>
    %c0_9 = arith.constant 0 : index
    %c0_10 = arith.constant 0 : index
    %10 = vector.load %arg5[%c0_9, %c0_10] : memref<8x512xf32, #tpu.memory_space<vmem>>, vector<8x512xf32>
    tpu.vector_store %arg5[%c0_9, %c0_10], %9 {strides = array<i32>} : memref<8x512xf32, #tpu.memory_space<vmem>>, vector<8x512xf32>,
    return
  }
  func.func @transform_0(%arg0: i32) -> (i32, i32) {
    %c0_i32 = arith.constant 0 : i32
    %c0_i32_0 = arith.constant 0 : i32
    return %arg0, %c0_i32 : i32, i32
  }
  func.func @transform_1(%arg0: i32) -> (i32, i32) {
    %c0_i32 = arith.constant 0 : i32
    %c0_i32_0 = arith.constant 0 : i32
    %c0_i32_1 = arith.constant 0 : i32
    return %c0_i32, %c0_i32_0 : i32, i32
  }
  func.func @transform_2(%arg0: i32) -> (i32, i32) {
    %c0_i32 = arith.constant 0 : i32
    %c0_i32_0 = arith.constant 0 : i32
    %c0_i32_1 = arith.constant 0 : i32
    return %c0_i32, %c0_i32_0 : i32, i32
  }
  func.func @transform_3(%arg0: i32) -> (i32, i32) {
    %c0_i32 = arith.constant 0 : i32
    %c0_i32_0 = arith.constant 0 : i32
    %c0_i32_1 = arith.constant 0 : i32
    return %c0_i32, %c0_i32_0 : i32, i32
  }
  func.func @transform_4(%arg0: i32) -> (i32, i32) {
    %c0_i32 = arith.constant 0 : i32
    %c0_i32_0 = arith.constant 0 : i32
    return %arg0, %c0_i32 : i32, i32
  }
}

</mosaic_0001>

<llo_original>
// kernel: tpu_custom_call.1
$region0: #{tpu_custom_call.1}
  #allocation0 [shape = 'u32[]', space=smem, size = 0x4, offset = 0x4, fixed_abs, tag = 'smem constant byte address 0x4 - core index']
  #allocation1 [shape = 'u32[144,128]{1,0:T(1,128)}', space=vmem, size = 0x12000, scoped, tag = 'internal scratch']
  %s0 = inlined_call_operand.hbm [shape: f32[24,512], index: 0, kind: input, shape index: {}]
  %s1 = inlined_call_operand.hbm [shape: f32[512,512], index: 1, kind: input, shape index: {}]
  %s2 = inlined_call_operand.vmem [shape: f32[1,512], index: 2, kind: input, shape index: {}]
  %s3 = inlined_call_operand.hbm [shape: f32[512,512], index: 3, kind: input, shape index: {}]
  %s4 = inlined_call_operand.hbm [shape: f32[24,512], index: 4, kind: output, shape index: {}]
  %s5 = sld [smem:[#allocation0]]
  $region61: #{tpu_custom_call.1} parent=0
    _
  %s7 = ssub.s32 1, %s5
  %s8 = scalar_select 0, %s7, %s5
  $region1: #{tpu_custom_call.1} parent=0
    #allocation2 [shape = 'u8[32768]{0}', space=vmem, size = 0x8000, scoped, tag = 'input window, operand 0']
    #allocation3 [shape = 's32[2]{0}', space=sflag, size = 0x8, scoped, tag = 'scoped memory for tpu_custom_call.1']
    #allocation4 [shape = 's32[2]{0}', space=sflag, size = 0x8, scoped, tag = 'scoped memory for tpu_custom_call.1']
    #allocation5 [shape = 'u8[1048576]{0}', space=vmem, size = 0x100000, scoped, tag = 'input window, operand 1, single buffered']
    #allocation6 [shape = 's32[1]{0}', space=sflag, size = 0x4, scoped, tag = 'scoped memory for tpu_custom_call.1']
    #allocation7 [shape = 'u8[1048576]{0}', space=vmem, size = 0x100000, scoped, tag = 'input window, operand 3, single buffered']
    #allocation8 [shape = 'u8[32768]{0}', space=vmem, size = 0x8000, scoped, tag = 'output window, operand 0']
    %9 = vsyncpa [#allocation3], 0
    %s10 = scalar_lea.sflag [#allocation3], 1
    %11 = vsyncpa %s10, 0
    %12 = vsyncpa [#allocation6], 0
    %13 = vsyncpa [#allocation4], 0
    %s14 = scalar_lea.sflag [#allocation4], 1
    %15 = vsyncpa %s14, 0
    loop: start=0, step=1, limit=5
    $region2: #{tpu_custom_call.1} parent=1 // loop_pre_header
      _
    $region3: #{tpu_custom_call.1} parent=1 // loop_header
      %s17 = sphi 0, %s21
      %p18 = scmp.ge.s32.totalorder %s17, 5
      %s27 = sphi 0, %s29
      %s30 = sphi 0, %s27
      %s31 = sphi 0, %s30
      %s47 = sphi 0, %s31
      %s51 = sphi 0, %s51
      %s53 = sphi 0, %s51
      %s54 = sphi 0, %s53
      %s68 = sphi 0, %s54
      %s72 = sphi 0, %s72
      %s74 = sphi 0, %s72
      %s75 = sphi 0, %s74
      %s89 = sphi 0, %s75
      %s93 = sphi 0, %s93
      %s95 = sphi 0, %s93
      %s96 = sphi 0, %s95
      %s110 = sphi 0, %s96
      %s116 = sphi 0, %s118
      %s119 = sphi 0, %s116
      %s120 = sphi 0, %s119
      %s136 = sphi 0, %s120
    $region4: #{tpu_custom_call.1} parent=1 // loop_header_branch
      %20 = sbr.rel (%p18) target = $region8
    $region5: #{tpu_custom_call.1} parent=1 // loop_body
      %s22 = ssub.s32 %s17, 1
      %s23 = ssub.s32 %s17, 2
      %s24 = sadd.s32 %s17, 1
      %s25 = ssub.s32 %s17, %s24
      %p26 = scmp.eq.s32.totalorder %s25, 0
      %s28 = sadd.s32 %s27, 1
      %s29 = scalar_select %p26, %s27, %s28
      %p32 = pneg %p26
      %p33 = scmp.eq.s32.totalorder %s17, 2
      %p34 = por %p32, %p33
      %p35 = scmp.ne.s32.totalorder %s27, %s30
      %p36 = scmp.eq.s32.totalorder %s17, 0
      %p37 = por %p35, %p36
      %p38 = scmp.ne.s32.totalorder %s27, %s30
      %p39 = scmp.eq.s32.totalorder %s22, 2
      %p40 = por %p38, %p39
      %p41 = scmp.ne.s32.totalorder %s30, %s31
      %p42 = scmp.eq.s32.totalorder %s22, 0
      %p43 = por %p41, %p42
      %p44 = scmp.ne.s32.totalorder %s30, %s31
      %p45 = scmp.eq.s32.totalorder %s23, 2
      %p46 = por %p44, %p45
      %p48 = scmp.ne.s32.totalorder %s31, %s47
      %p49 = scmp.eq.s32.totalorder %s23, 0
      %p50 = por %p48, %p49
      %s52 = sadd.s32 %s51, 1
      %p55 = scmp.eq.s32.totalorder %s17, 2
      %p56 = scmp.ne.s32.totalorder %s51, %s53
      %p57 = scmp.eq.s32.totalorder %s17, 0
      %p58 = por %p56, %p57
      %p59 = scmp.ne.s32.totalorder %s51, %s53
      %p60 = scmp.eq.s32.totalorder %s22, 2
      %p61 = por %p59, %p60
      %p62 = scmp.ne.s32.totalorder %s53, %s54
      %p63 = scmp.eq.s32.totalorder %s22, 0
      %p64 = por %p62, %p63
      %p65 = scmp.ne.s32.totalorder %s53, %s54
      %p66 = scmp.eq.s32.totalorder %s23, 2
      %p67 = por %p65, %p66
      %p69 = scmp.ne.s32.totalorder %s54, %s68
      %p70 = scmp.eq.s32.totalorder %s23, 0
      %p71 = por %p69, %p70
      %s73 = sadd.s32 %s72, 1
      %p76 = scmp.eq.s32.totalorder %s17, 2
      %p77 = scmp.ne.s32.totalorder %s72, %s74
      %p78 = scmp.eq.s32.totalorder %s17, 0
      %p79 = por %p77, %p78
      %p80 = scmp.ne.s32.totalorder %s72, %s74
      %p81 = scmp.eq.s32.totalorder %s22, 2
      %p82 = por %p80, %p81
      %p83 = scmp.ne.s32.totalorder %s74, %s75
      %p84 = scmp.eq.s32.totalorder %s22, 0
      %p85 = por %p83, %p84
      %p86 = scmp.ne.s32.totalorder %s74, %s75
      %p87 = scmp.eq.s32.totalorder %s23, 2
      %p88 = por %p86, %p87
      %p90 = scmp.ne.s32.totalorder %s75, %s89
      %p91 = scmp.eq.s32.totalorder %s23, 0
      %p92 = por %p90, %p91
      %s94 = sadd.s32 %s93, 1
      %p97 = scmp.eq.s32.totalorder %s17, 2
      %p98 = scmp.ne.s32.totalorder %s93, %s95
      %p99 = scmp.eq.s32.totalorder %s17, 0
      %p100 = por %p98, %p99
      %p101 = scmp.ne.s32.totalorder %s93, %s95
      %p102 = scmp.eq.s32.totalorder %s22, 2
      %p103 = por %p101, %p102
      %p104 = scmp.ne.s32.totalorder %s95, %s96
      %p105 = scmp.eq.s32.totalorder %s22, 0
      %p106 = por %p104, %p105
      %p107 = scmp.ne.s32.totalorder %s95, %s96
      %p108 = scmp.eq.s32.totalorder %s23, 2
      %p109 = por %p107, %p108
      %p111 = scmp.ne.s32.totalorder %s96, %s110
      %p112 = scmp.eq.s32.totalorder %s23, 0
      %p113 = por %p111, %p112
      %s114 = ssub.s32 %s17, %s24
      %p115 = scmp.eq.s32.totalorder %s114, 0
      %s117 = sadd.s32 %s116, 1
      %s118 = scalar_select %p115, %s116, %s117
      %p121 = pneg %p115
      %p122 = scmp.eq.s32.totalorder %s17, 2
      %p123 = por %p121, %p122
      %p124 = scmp.ne.s32.totalorder %s116, %s119
      %p125 = scmp.eq.s32.totalorder %s17, 0
      %p126 = por %p124, %p125
      %p127 = scmp.ne.s32.totalorder %s116, %s119
      %p128 = scmp.eq.s32.totalorder %s22, 2
      %p129 = por %p127, %p128
      %p130 = scmp.ne.s32.totalorder %s119, %s120
      %p131 = scmp.eq.s32.totalorder %s22, 0
      %p132 = por %p130, %p131
      %p133 = scmp.ne.s32.totalorder %s119, %s120
      %p134 = scmp.eq.s32.totalorder %s23, 2
      %p135 = por %p133, %p134
      %p137 = scmp.ne.s32.totalorder %s120, %s136
      %p138 = scmp.eq.s32.totalorder %s23, 0
      %p139 = por %p137, %p138
      %p140 = scmp.le.s32.totalorder 1, %s17
      %p141 = scmp.lt.s32.totalorder %s17, 4
      %p142 = pnand %p140, %p141
      %p143 = pneg %p142
      // Predicated region
      $region9: #{tpu_custom_call.1} parent=5 // pred_check
        _
      $region10: #{tpu_custom_call.1} parent=5 // pred_check_branch
        %145 = sbr.rel (%p142) target = $region12
      $region11: #{tpu_custom_call.1} parent=5 // pred_region
        %s146 = ssub.s32 %s17, 1
        // Predicated region
        $region13: #{tpu_custom_call.1} parent=11 // pred_check
          %p147 = pneg %p64
        $region14: #{tpu_custom_call.1} parent=11 // pred_check_branch
          %149 = sbr.rel (%p147) target = $region16
        $region15: #{tpu_custom_call.1} parent=11 // pred_region
          %s151 = ssub.s32 32768, 32768
          %152 = vsyncadd [#allocation6], %s151
          %s153 = sshll.u32 [#allocation5], 4
          %s154 = int_to_ptr.vmem [resolvable:$true] %s153
          %159 = dma.hbm_to_vmem [thread:$0]  %s1, 32768, %s154, [#allocation6], 512, 512, 32
        $region16: #{tpu_custom_call.1} parent=11 // pred_fallthru
          _
        // Predicated region
        $region17: #{tpu_custom_call.1} parent=11 // pred_check
          %p160 = pneg %p85
        $region18: #{tpu_custom_call.1} parent=11 // pred_check_branch
          %162 = sbr.rel (%p160) target = $region20
        $region19: #{tpu_custom_call.1} parent=11 // pred_region
          _
        $region20: #{tpu_custom_call.1} parent=11 // pred_fallthru
          _
        // Predicated region
        $region21: #{tpu_custom_call.1} parent=11 // pred_check
          %p163 = pneg %p106
        $region22: #{tpu_custom_call.1} parent=11 // pred_check_branch
          %165 = sbr.rel (%p163) target = $region24
        $region23: #{tpu_custom_call.1} parent=11 // pred_region
          %s167 = ssub.s32 32768, 32768
          %168 = vsyncadd [#allocation6], %s167
          %s169 = sshll.u32 [#allocation7], 4
          %s170 = int_to_ptr.vmem [resolvable:$true] %s169
          %175 = dma.hbm_to_vmem [thread:$0]  %s3, 32768, %s170, [#allocation6], 512, 512, 32
        $region24: #{tpu_custom_call.1} parent=11 // pred_fallthru
          _
      $region12: #{tpu_custom_call.1} parent=5 // pred_fallthru
        _
      %p176 = scmp.lt.s32.totalorder %s17, 3
      // Predicated region
      $region25: #{tpu_custom_call.1} parent=5 // pred_check
        %p177 = pneg %p176
      $region26: #{tpu_custom_call.1} parent=5 // pred_check_branch
        %179 = sbr.rel (%p177) target = $region28
      $region27: #{tpu_custom_call.1} parent=5 // pred_region
        // Predicated region
        $region29: #{tpu_custom_call.1} parent=27 // pred_check
          %p180 = pneg %p37
        $region30: #{tpu_custom_call.1} parent=27 // pred_check_branch
          %182 = sbr.rel (%p180) target = $region32
        $region31: #{tpu_custom_call.1} parent=27 // pred_region
          %s183 = sand.u32 %s27, 1
          %s184 = scalar_lea.sflag [#allocation3], %s183
          %s185 = sand.u32 %s27, 1
          %s186 = smul.addr %s185, 32
          %s187 = scalar_lea.vmem [#allocation2], %s186
          %s189 = ssub.s32 512, 512
          %190 = vsyncadd %s184, %s189
          %s191 = smul.addr %s17, 4
          %s192 = smul.addr %s191, 128
          %s193 = scalar_lea.hbm %s0, %s192
          %s195 = sshll.u32 %s187, 4
          %s196 = int_to_ptr.vmem [resolvable:$true] %s195
          %198 = dma.hbm_to_vmem [thread:$0]  %s193, 512, %s196, %s184
        $region32: #{tpu_custom_call.1} parent=27 // pred_fallthru
          _
      $region28: #{tpu_custom_call.1} parent=5 // pred_fallthru
        _
      %p199 = scmp.le.s32.totalorder 1, %s17
      %p200 = scmp.lt.s32.totalorder %s17, 4
      %p201 = pnand %p199, %p200
      %p202 = pneg %p201
      // Predicated region
      $region33: #{tpu_custom_call.1} parent=5 // pred_check
        _
      $region34: #{tpu_custom_call.1} parent=5 // pred_check_branch
        %204 = sbr.rel (%p201) target = $region36
      $region35: #{tpu_custom_call.1} parent=5 // pred_region
        %s205 = ssub.s32 %s17, 1
        %s206 = sand.u32 %s30, 1
        %s207 = scalar_lea.sflag [#allocation3], %s206
        %s208 = sand.u32 %s30, 1
        %s209 = smul.addr %s208, 32
        %s210 = scalar_lea.vmem [#allocation2], %s209
        // Predicated region
        $region37: #{tpu_custom_call.1} parent=35 // pred_check
          %p211 = pneg %p43
        $region38: #{tpu_custom_call.1} parent=35 // pred_check_branch
          %213 = sbr.rel (%p211) target = $region40
        $region39: #{tpu_custom_call.1} parent=35 // pred_region
          %214 = dma.done %s207, 512
        $region40: #{tpu_custom_call.1} parent=35 // pred_fallthru
          _
        // Predicated region
        $region41: #{tpu_custom_call.1} parent=35 // pred_check
          %p215 = pneg %p64
        $region42: #{tpu_custom_call.1} parent=35 // pred_check_branch
          %217 = sbr.rel (%p215) target = $region44
        $region43: #{tpu_custom_call.1} parent=35 // pred_region
          %218 = dma.done [#allocation6], 32768
        $region44: #{tpu_custom_call.1} parent=35 // pred_fallthru
          _
        // Predicated region
        $region45: #{tpu_custom_call.1} parent=35 // pred_check
          %p219 = pneg %p106
        $region46: #{tpu_custom_call.1} parent=35 // pred_check_branch
          %221 = sbr.rel (%p219) target = $region48
        $region47: #{tpu_custom_call.1} parent=35 // pred_region
          %222 = dma.done [#allocation6], 32768
        $region48: #{tpu_custom_call.1} parent=35 // pred_fallthru
          _
        %s223 = sand.u32 %s30, 1
        %s224 = scalar_lea.sflag [#allocation3], %s223
        %s225 = sand.u32 %s30, 1
        %s226 = smul.addr %s225, 32
        %s227 = scalar_lea.vmem [#allocation2], %s226
        %p228 = pneg %p43
        %p229 = pneg %p40
        %p230 = pneg %p64
        %p231 = pneg %p61
        %p232 = pneg %p85
        %p233 = pneg %p82
        %p234 = pneg %p106
        %p235 = pneg %p103
        %p236 = pneg %p132
        %p237 = pneg %p129
        %s238 = sand.u32 %s119, 1
        %s239 = scalar_lea.sflag [#allocation4], %s238
        %s240 = sand.u32 %s119, 1
        %s241 = smul.addr %s240, 32
        %s242 = scalar_lea.vmem [#allocation8], %s241
        %v243 = vld [vmem:[%s210] sm:$0xff]
        %v244 = vld [vmem:[%s210 + $0x8] sm:$0xff]
        %v245 = vld [vmem:[%s210 + $0x10] sm:$0xff]
        %v246 = vld [vmem:[%s210 + $0x18] sm:$0xff]
        %v247 = vld [vmem:[#allocation5] sm:$0xff]
        %v248 = vld [vmem:[#allocation5 + $0x8] sm:$0xff]
        %v249 = vld [vmem:[#allocation5 + $0x10] sm:$0xff]
        %v250 = vld [vmem:[#allocation5 + $0x18] sm:$0xff]
        %v251 = vld [vmem:[#allocation5 + $0x20] sm:$0xff]
        %v252 = vld [vmem:[#allocation5 + $0x28] sm:$0xff]
        %v253 = vld [vmem:[#allocation5 + $0x30] sm:$0xff]
        %v254 = vld [vmem:[#allocation5 + $0x38] sm:$0xff]
        %v255 = vld [vmem:[#allocation5 + $0x40] sm:$0xff]
        %v256 = vld [vmem:[#allocation5 + $0x48] sm:$0xff]
        %v257 = vld [vmem:[#allocation5 + $0x50] sm:$0xff]
        %v258 = vld [vmem:[#allocation5 + $0x58] sm:$0xff]
        %v259 = vld [vmem:[#allocation5 + $0x60] sm:$0xff]
        %v260 = vld [vmem:[#allocation5 + $0x68] sm:$0xff]
        %v261 = vld [vmem:[#allocation5 + $0x70] sm:$0xff]
        %v262 = vld [vmem:[#allocation5 + $0x78] sm:$0xff]
        %v263 = vld [vmem:[#allocation5 + $0x80] sm:$0xff]
        %v264 = vld [vmem:[#allocation5 + $0x88] sm:$0xff]
        %v265 = vld [vmem:[#allocation5 + $0x90] sm:$0xff]
        %v266 = vld [vmem:[#allocation5 + $0x98] sm:$0xff]
        %v267 = vld [vmem:[#allocation5 + $0xa0] sm:$0xff]
        %v268 = vld [vmem:[#allocation5 + $0xa8] sm:$0xff]
        %v269 = vld [vmem:[#allocation5 + $0xb0] sm:$0xff]
        %v270 = vld [vmem:[#allocation5 + $0xb8] sm:$0xff]
        %v271 = vld [vmem:[#allocation5 + $0xc0] sm:$0xff]
        %v272 = vld [vmem:[#allocation5 + $0xc8] sm:$0xff]
        %v273 = vld [vmem:[#allocation5 + $0xd0] sm:$0xff]
        %v274 = vld [vmem:[#allocation5 + $0xd8] sm:$0xff]
        %v275 = vld [vmem:[#allocation5 + $0xe0] sm:$0xff]
        %v276 = vld [vmem:[#allocation5 + $0xe8] sm:$0xff]
        %v277 = vld [vmem:[#allocation5 + $0xf0] sm:$0xff]
        %v278 = vld [vmem:[#allocation5 + $0xf8] sm:$0xff]
        %v279 = vld [vmem:[#allocation5 + $0x100] sm:$0xff]
        %v280 = vld [vmem:[#allocation5 + $0x108] sm:$0xff]
        %v281 = vld [vmem:[#allocation5 + $0x110] sm:$0xff]
        %v282 = vld [vmem:[#allocation5 + $0x118] sm:$0xff]
        %v283 = vld [vmem:[#allocation5 + $0x120] sm:$0xff]
        %v284 = vld [vmem:[#allocation5 + $0x128] sm:$0xff]
        %v285 = vld [vmem:[#allocation5 + $0x130] sm:$0xff]
        %v286 = vld [vmem:[#allocation5 + $0x138] sm:$0xff]
        %v287 = vld [vmem:[#allocation5 + $0x140] sm:$0xff]
        %v288 = vld [vmem:[#allocation5 + $0x148] sm:$0xff]
        %v289 = vld [vmem:[#allocation5 + $0x150] sm:$0xff]
        %v290 = vld [vmem:[#allocation5 + $0x158] sm:$0xff]
        %v291 = vld [vmem:[#allocation5 + $0x160] sm:$0xff]
        %v292 = vld [vmem:[#allocation5 + $0x168] sm:$0xff]
        %v293 = vld [vmem:[#allocation5 + $0x170] sm:$0xff]
        %v294 = vld [vmem:[#allocation5 + $0x178] sm:$0xff]
        %v295 = vld [vmem:[#allocation5 + $0x180] sm:$0xff]
        %v296 = vld [vmem:[#allocation5 + $0x188] sm:$0xff]
        %v297 = vld [vmem:[#allocation5 + $0x190] sm:$0xff]
        %v298 = vld [vmem:[#allocation5 + $0x198] sm:$0xff]
        %v299 = vld [vmem:[#allocation5 + $0x1a0] sm:$0xff]
        %v300 = vld [vmem:[#allocation5 + $0x1a8] sm:$0xff]
        %v301 = vld [vmem:[#allocation5 + $0x1b0] sm:$0xff]
        %v302 = vld [vmem:[#allocation5 + $0x1b8] sm:$0xff]
        %v303 = vld [vmem:[#allocation5 + $0x1c0] sm:$0xff]
        %v304 = vld [vmem:[#allocation5 + $0x1c8] sm:$0xff]
        %v305 = vld [vmem:[#allocation5 + $0x1d0] sm:$0xff]
        %v306 = vld [vmem:[#allocation5 + $0x1d8] sm:$0xff]
        %v307 = vld [vmem:[#allocation5 + $0x1e0] sm:$0xff]
        %v308 = vld [vmem:[#allocation5 + $0x1e8] sm:$0xff]
        %v309 = vld [vmem:[#allocation5 + $0x1f0] sm:$0xff]
        %v310 = vld [vmem:[#allocation5 + $0x1f8] sm:$0xff]
        %v311 = vld [vmem:[#allocation5 + $0x200] sm:$0xff]
        %v312 = vld [vmem:[#allocation5 + $0x208] sm:$0xff]
        %v313 = vld [vmem:[#allocation5 + $0x210] sm:$0xff]
        %v314 = vld [vmem:[#allocation5 + $0x218] sm:$0xff]
        %v315 = vld [vmem:[#allocation5 + $0x220] sm:$0xff]
        %v316 = vld [vmem:[#allocation5 + $0x228] sm:$0xff]
        %v317 = vld [vmem:[#allocation5 + $0x230] sm:$0xff]
        %v318 = vld [vmem:[#allocation5 + $0x238] sm:$0xff]
        %v319 = vld [vmem:[#allocation5 + $0x240] sm:$0xff]
        %v320 = vld [vmem:[#allocation5 + $0x248] sm:$0xff]
        %v321 = vld [vmem:[#allocation5 + $0x250] sm:$0xff]
        %v322 = vld [vmem:[#allocation5 + $0x258] sm:$0xff]
        %v323 = vld [vmem:[#allocation5 + $0x260] sm:$0xff]
        %v324 = vld [vmem:[#allocation5 + $0x268] sm:$0xff]
        %v325 = vld [vmem:[#allocation5 + $0x270] sm:$0xff]
        %v326 = vld [vmem:[#allocation5 + $0x278] sm:$0xff]
        %v327 = vld [vmem:[#allocation5 + $0x280] sm:$0xff]
        %v328 = vld [vmem:[#allocation5 + $0x288] sm:$0xff]
        %v329 = vld [vmem:[#allocation5 + $0x290] sm:$0xff]
        %v330 = vld [vmem:[#allocation5 + $0x298] sm:$0xff]
        %v331 = vld [vmem:[#allocation5 + $0x2a0] sm:$0xff]
        %v332 = vld [vmem:[#allocation5 + $0x2a8] sm:$0xff]
        %v333 = vld [vmem:[#allocation5 + $0x2b0] sm:$0xff]
        %v334 = vld [vmem:[#allocation5 + $0x2b8] sm:$0xff]
        %v335 = vld [vmem:[#allocation5 + $0x2c0] sm:$0xff]
        %v336 = vld [vmem:[#allocation5 + $0x2c8] sm:$0xff]
        %v337 = vld [vmem:[#allocation5 + $0x2d0] sm:$0xff]
        %v338 = vld [vmem:[#allocation5 + $0x2d8] sm:$0xff]
        %v339 = vld [vmem:[#allocation5 + $0x2e0] sm:$0xff]
        %v340 = vld [vmem:[#allocation5 + $0x2e8] sm:$0xff]
        %v341 = vld [vmem:[#allocation5 + $0x2f0] sm:$0xff]
        %v342 = vld [vmem:[#allocation5 + $0x2f8] sm:$0xff]
        %v343 = vld [vmem:[#allocation5 + $0x300] sm:$0xff]
        %v344 = vld [vmem:[#allocation5 + $0x308] sm:$0xff]
        %v345 = vld [vmem:[#allocation5 + $0x310] sm:$0xff]
        %v346 = vld [vmem:[#allocation5 + $0x318] sm:$0xff]
        %v347 = vld [vmem:[#allocation5 + $0x320] sm:$0xff]
        %v348 = vld [vmem:[#allocation5 + $0x328] sm:$0xff]
        %v349 = vld [vmem:[#allocation5 + $0x330] sm:$0xff]
        %v350 = vld [vmem:[#allocation5 + $0x338] sm:$0xff]
        %v351 = vld [vmem:[#allocation5 + $0x340] sm:$0xff]
        %v352 = vld [vmem:[#allocation5 + $0x348] sm:$0xff]
        %v353 = vld [vmem:[#allocation5 + $0x350] sm:$0xff]
        %v354 = vld [vmem:[#allocation5 + $0x358] sm:$0xff]
        %v355 = vld [vmem:[#allocation5 + $0x360] sm:$0xff]
        %v356 = vld [vmem:[#allocation5 + $0x368] sm:$0xff]
        %v357 = vld [vmem:[#allocation5 + $0x370] sm:$0xff]
        %v358 = vld [vmem:[#allocation5 + $0x378] sm:$0xff]
        %v359 = vld [vmem:[#allocation5 + $0x380] sm:$0xff]
        %v360 = vld [vmem:[#allocation5 + $0x388] sm:$0xff]
        %v361 = vld [vmem:[#allocation5 + $0x390] sm:$0xff]
        %v362 = vld [vmem:[#allocation5 + $0x398] sm:$0xff]
        %v363 = vld [vmem:[#allocation5 + $0x3a0] sm:$0xff]
        %v364 = vld [vmem:[#allocation5 + $0x3a8] sm:$0xff]
        %v365 = vld [vmem:[#allocation5 + $0x3b0] sm:$0xff]
        %v366 = vld [vmem:[#allocation5 + $0x3b8] sm:$0xff]
        %v367 = vld [vmem:[#allocation5 + $0x3c0] sm:$0xff]
        %v368 = vld [vmem:[#allocation5 + $0x3c8] sm:$0xff]
        %v369 = vld [vmem:[#allocation5 + $0x3d0] sm:$0xff]
        %v370 = vld [vmem:[#allocation5 + $0x3d8] sm:$0xff]
        %v371 = vld [vmem:[#allocation5 + $0x3e0] sm:$0xff]
        %v372 = vld [vmem:[#allocation5 + $0x3e8] sm:$0xff]
        %v373 = vld [vmem:[#allocation5 + $0x3f0] sm:$0xff]
        %v374 = vld [vmem:[#allocation5 + $0x3f8] sm:$0xff]
        %v375 = vld [vmem:[#allocation5 + $0x400] sm:$0xff]
        %v376 = vld [vmem:[#allocation5 + $0x408] sm:$0xff]
        %v377 = vld [vmem:[#allocation5 + $0x410] sm:$0xff]
        %v378 = vld [vmem:[#allocation5 + $0x418] sm:$0xff]
        %v379 = vld [vmem:[#allocation5 + $0x420] sm:$0xff]
        %v380 = vld [vmem:[#allocation5 + $0x428] sm:$0xff]
        %v381 = vld [vmem:[#allocation5 + $0x430] sm:$0xff]
        %v382 = vld [vmem:[#allocation5 + $0x438] sm:$0xff]
        %v383 = vld [vmem:[#allocation5 + $0x440] sm:$0xff]
        %v384 = vld [vmem:[#allocation5 + $0x448] sm:$0xff]
        %v385 = vld [vmem:[#allocation5 + $0x450] sm:$0xff]
        %v386 = vld [vmem:[#allocation5 + $0x458] sm:$0xff]
        %v387 = vld [vmem:[#allocation5 + $0x460] sm:$0xff]
        %v388 = vld [vmem:[#allocation5 + $0x468] sm:$0xff]
        %v389 = vld [vmem:[#allocation5 + $0x470] sm:$0xff]
        %v390 = vld [vmem:[#allocation5 + $0x478] sm:$0xff]
        %v391 = vld [vmem:[#allocation5 + $0x480] sm:$0xff]
        %v392 = vld [vmem:[#allocation5 + $0x488] sm:$0xff]
        %v393 = vld [vmem:[#allocation5 + $0x490] sm:$0xff]
        %v394 = vld [vmem:[#allocation5 + $0x498] sm:$0xff]
        %v395 = vld [vmem:[#allocation5 + $0x4a0] sm:$0xff]
        %v396 = vld [vmem:[#allocation5 + $0x4a8] sm:$0xff]
        %v397 = vld [vmem:[#allocation5 + $0x4b0] sm:$0xff]
        %v398 = vld [vmem:[#allocation5 + $0x4b8] sm:$0xff]
        %v399 = vld [vmem:[#allocation5 + $0x4c0] sm:$0xff]
        %v400 = vld [vmem:[#allocation5 + $0x4c8] sm:$0xff]
        %v401 = vld [vmem:[#allocation5 + $0x4d0] sm:$0xff]
        %v402 = vld [vmem:[#allocation5 + $0x4d8] sm:$0xff]
        %v403 = vld [vmem:[#allocation5 + $0x4e0] sm:$0xff]
        %v404 = vld [vmem:[#allocation5 + $0x4e8] sm:$0xff]
        %v405 = vld [vmem:[#allocation5 + $0x4f0] sm:$0xff]
        %v406 = vld [vmem:[#allocation5 + $0x4f8] sm:$0xff]
        %v407 = vld [vmem:[#allocation5 + $0x500] sm:$0xff]
        %v408 = vld [vmem:[#allocation5 + $0x508] sm:$0xff]
        %v409 = vld [vmem:[#allocation5 + $0x510] sm:$0xff]
        %v410 = vld [vmem:[#allocation5 + $0x518] sm:$0xff]
        %v411 = vld [vmem:[#allocation5 + $0x520] sm:$0xff]
        %v412 = vld [vmem:[#allocation5 + $0x528] sm:$0xff]
        %v413 = vld [vmem:[#allocation5 + $0x530] sm:$0xff]
        %v414 = vld [vmem:[#allocation5 + $0x538] sm:$0xff]
        %v415 = vld [vmem:[#allocation5 + $0x540] sm:$0xff]
        %v416 = vld [vmem:[#allocation5 + $0x548] sm:$0xff]
        %v417 = vld [vmem:[#allocation5 + $0x550] sm:$0xff]
        %v418 = vld [vmem:[#allocation5 + $0x558] sm:$0xff]
        %v419 = vld [vmem:[#allocation5 + $0x560] sm:$0xff]
        %v420 = vld [vmem:[#allocation5 + $0x568] sm:$0xff]
        %v421 = vld [vmem:[#allocation5 + $0x570] sm:$0xff]
        %v422 = vld [vmem:[#allocation5 + $0x578] sm:$0xff]
        %v423 = vld [vmem:[#allocation5 + $0x580] sm:$0xff]
        %v424 = vld [vmem:[#allocation5 + $0x588] sm:$0xff]
        %v425 = vld [vmem:[#allocation5 + $0x590] sm:$0xff]
        %v426 = vld [vmem:[#allocation5 + $0x598] sm:$0xff]
        %v427 = vld [vmem:[#allocation5 + $0x5a0] sm:$0xff]
        %v428 = vld [vmem:[#allocation5 + $0x5a8] sm:$0xff]
        %v429 = vld [vmem:[#allocation5 + $0x5b0] sm:$0xff]
        %v430 = vld [vmem:[#allocation5 + $0x5b8] sm:$0xff]
        %v431 = vld [vmem:[#allocation5 + $0x5c0] sm:$0xff]
        %v432 = vld [vmem:[#allocation5 + $0x5c8] sm:$0xff]
        %v433 = vld [vmem:[#allocation5 + $0x5d0] sm:$0xff]
        %v434 = vld [vmem:[#allocation5 + $0x5d8] sm:$0xff]
        %v435 = vld [vmem:[#allocation5 + $0x5e0] sm:$0xff]
        %v436 = vld [vmem:[#allocation5 + $0x5e8] sm:$0xff]
        %v437 = vld [vmem:[#allocation5 + $0x5f0] sm:$0xff]
        %v438 = vld [vmem:[#allocation5 + $0x5f8] sm:$0xff]
        %v439 = vld [vmem:[#allocation5 + $0x600] sm:$0xff]
        %v440 = vld [vmem:[#allocation5 + $0x608] sm:$0xff]
        %v441 = vld [vmem:[#allocation5 + $0x610] sm:$0xff]
        %v442 = vld [vmem:[#allocation5 + $0x618] sm:$0xff]
        %v443 = vld [vmem:[#allocation5 + $0x620] sm:$0xff]
        %v444 = vld [vmem:[#allocation5 + $0x628] sm:$0xff]
        %v445 = vld [vmem:[#allocation5 + $0x630] sm:$0xff]
        %v446 = vld [vmem:[#allocation5 + $0x638] sm:$0xff]
        %v447 = vld [vmem:[#allocation5 + $0x640] sm:$0xff]
        %v448 = vld [vmem:[#allocation5 + $0x648] sm:$0xff]
        %v449 = vld [vmem:[#allocation5 + $0x650] sm:$0xff]
        %v450 = vld [vmem:[#allocation5 + $0x658] sm:$0xff]
        %v451 = vld [vmem:[#allocation5 + $0x660] sm:$0xff]
        %v452 = vld [vmem:[#allocation5 + $0x668] sm:$0xff]
        %v453 = vld [vmem:[#allocation5 + $0x670] sm:$0xff]
        %v454 = vld [vmem:[#allocation5 + $0x678] sm:$0xff]
        %v455 = vld [vmem:[#allocation5 + $0x680] sm:$0xff]
        %v456 = vld [vmem:[#allocation5 + $0x688] sm:$0xff]
        %v457 = vld [vmem:[#allocation5 + $0x690] sm:$0xff]
        %v458 = vld [vmem:[#allocation5 + $0x698] sm:$0xff]
        %v459 = vld [vmem:[#allocation5 + $0x6a0] sm:$0xff]
        %v460 = vld [vmem:[#allocation5 + $0x6a8] sm:$0xff]
        %v461 = vld [vmem:[#allocation5 + $0x6b0] sm:$0xff]
        %v462 = vld [vmem:[#allocation5 + $0x6b8] sm:$0xff]
        %v463 = vld [vmem:[#allocation5 + $0x6c0] sm:$0xff]
        %v464 = vld [vmem:[#allocation5 + $0x6c8] sm:$0xff]
        %v465 = vld [vmem:[#allocation5 + $0x6d0] sm:$0xff]
        %v466 = vld [vmem:[#allocation5 + $0x6d8] sm:$0xff]
        %v467 = vld [vmem:[#allocation5 + $0x6e0] sm:$0xff]
        %v468 = vld [vmem:[#allocation5 + $0x6e8] sm:$0xff]
        %v469 = vld [vmem:[#allocation5 + $0x6f0] sm:$0xff]
        %v470 = vld [vmem:[#allocation5 + $0x6f8] sm:$0xff]
        %v471 = vld [vmem:[#allocation5 + $0x700] sm:$0xff]
        %v472 = vld [vmem:[#allocation5 + $0x708] sm:$0xff]
        %v473 = vld [vmem:[#allocation5 + $0x710] sm:$0xff]
        %v474 = vld [vmem:[#allocation5 + $0x718] sm:$0xff]
        %v475 = vld [vmem:[#allocation5 + $0x720] sm:$0xff]
        %v476 = vld [vmem:[#allocation5 + $0x728] sm:$0xff]
        %v477 = vld [vmem:[#allocation5 + $0x730] sm:$0xff]
        %v478 = vld [vmem:[#allocation5 + $0x738] sm:$0xff]
        %v479 = vld [vmem:[#allocation5 + $0x740] sm:$0xff]
        %v480 = vld [vmem:[#allocation5 + $0x748] sm:$0xff]
        %v481 = vld [vmem:[#allocation5 + $0x750] sm:$0xff]
        %v482 = vld [vmem:[#allocation5 + $0x758] sm:$0xff]
        %v483 = vld [vmem:[#allocation5 + $0x760] sm:$0xff]
        %v484 = vld [vmem:[#allocation5 + $0x768] sm:$0xff]
        %v485 = vld [vmem:[#allocation5 + $0x770] sm:$0xff]
        %v486 = vld [vmem:[#allocation5 + $0x778] sm:$0xff]
        %v487 = vld [vmem:[#allocation5 + $0x780] sm:$0xff]
        %v488 = vld [vmem:[#allocation5 + $0x788] sm:$0xff]
        %v489 = vld [vmem:[#allocation5 + $0x790] sm:$0xff]
        %v490 = vld [vmem:[#allocation5 + $0x798] sm:$0xff]
        %v491 = vld [vmem:[#allocation5 + $0x7a0] sm:$0xff]
        %v492 = vld [vmem:[#allocation5 + $0x7a8] sm:$0xff]
        %v493 = vld [vmem:[#allocation5 + $0x7b0] sm:$0xff]
        %v494 = vld [vmem:[#allocation5 + $0x7b8] sm:$0xff]
        %v495 = vld [vmem:[#allocation5 + $0x7c0] sm:$0xff]
        %v496 = vld [vmem:[#allocation5 + $0x7c8] sm:$0xff]
        %v497 = vld [vmem:[#allocation5 + $0x7d0] sm:$0xff]
        %v498 = vld [vmem:[#allocation5 + $0x7d8] sm:$0xff]
        %v499 = vld [vmem:[#allocation5 + $0x7e0] sm:$0xff]
        %v500 = vld [vmem:[#allocation5 + $0x7e8] sm:$0xff]
        %v501 = vld [vmem:[#allocation5 + $0x7f0] sm:$0xff]
        %v502 = vld [vmem:[#allocation5 + $0x7f8] sm:$0xff]
        %v503 = vld [vmem:[%s2] sm:$0xf]
        %v505 = vlaneseq
        %v506 = vshrl.u32 %v505, 7
        %v507 = vsub.s32 0, %v506
        %v508 = vrot.slane %v503, %v507
        %v509 = vlaneseq
        %v510 = vshrl.u32 %v509, 7
        %v511 = vsub.s32 1, %v510
        %v512 = vrot.slane %v503, %v511
        %v513 = vlaneseq
        %v514 = vshrl.u32 %v513, 7
        %v515 = vsub.s32 2, %v514
        %v516 = vrot.slane %v503, %v515
        %v517 = vlaneseq
        %v518 = vshrl.u32 %v517, 7
        %v519 = vsub.s32 3, %v518
        %v520 = vrot.slane %v503, %v519
        %525 = vmatprep.subr.mxu0 %v248
        %526 = vmatpush1.msra.mxu0 %v247
        %527 = vmatprep.subr.mxu0 %v252
        %528 = vmatpush1.msra.mxu0 %v251
        %529 = vmatprep.subr.mxu0 %v256
        %530 = vmatpush1.msra.mxu0 %v255
        %531 = vmatprep.subr.mxu0 %v260
        %532 = vmatpush1.msra.mxu0 %v259
        %533 = vmatprep.subr.mxu0 %v264
        %534 = vmatpush1.msra.mxu0 %v263
        %535 = vmatprep.subr.mxu0 %v268
        %536 = vmatpush1.msra.mxu0 %v267
        %537 = vmatprep.subr.mxu0 %v272
        %538 = vmatpush1.msra.mxu0 %v271
        %539 = vmatprep.subr.mxu0 %v276
        %540 = vmatpush1.msra.mxu0 %v275
        %541 = vmatprep.subr.mxu0 %v280
        %542 = vmatpush1.msra.mxu0 %v279
        %543 = vmatprep.subr.mxu0 %v284
        %544 = vmatpush1.msra.mxu0 %v283
        %545 = vmatprep.subr.mxu0 %v288
        %546 = vmatpush1.msra.mxu0 %v287
        %547 = vmatprep.subr.mxu0 %v292
        %548 = vmatpush1.msra.mxu0 %v291
        %549 = vmatprep.subr.mxu0 %v296
        %550 = vmatpush1.msra.mxu0 %v295
        %551 = vmatprep.subr.mxu0 %v300
        %552 = vmatpush1.msra.mxu0 %v299
        %553 = vmatprep.subr.mxu0 %v304
        %554 = vmatpush1.msra.mxu0 %v303
        %555 = vmatprep.subr.mxu0 %v308
        %556 = vmatpush1.msra.mxu0 %v307
        %557 = vmatprep.subr.mxu0 %v312
        %558 = vmatpush1.msra.mxu0 %v311
        %559 = vmatprep.subr.mxu0 %v316
        %560 = vmatpush1.msra.mxu0 %v315
        %561 = vmatprep.subr.mxu0 %v320
        %562 = vmatpush1.msra.mxu0 %v319
        %563 = vmatprep.subr.mxu0 %v324
        %564 = vmatpush1.msra.mxu0 %v323
        %565 = vmatprep.subr.mxu0 %v328
        %566 = vmatpush1.msra.mxu0 %v327
        %567 = vmatprep.subr.mxu0 %v332
        %568 = vmatpush1.msra.mxu0 %v331
        %569 = vmatprep.subr.mxu0 %v336
        %570 = vmatpush1.msra.mxu0 %v335
        %571 = vmatprep.subr.mxu0 %v340
        %572 = vmatpush1.msra.mxu0 %v339
        %573 = vmatprep.subr.mxu0 %v344
        %574 = vmatpush1.msra.mxu0 %v343
        %575 = vmatprep.subr.mxu0 %v348
        %576 = vmatpush1.msra.mxu0 %v347
        %577 = vmatprep.subr.mxu0 %v352
        %578 = vmatpush1.msra.mxu0 %v351
        %579 = vmatprep.subr.mxu0 %v356
        %580 = vmatpush1.msra.mxu0 %v355
        %581 = vmatprep.subr.mxu0 %v360
        %582 = vmatpush1.msra.mxu0 %v359
        %583 = vmatprep.subr.mxu0 %v364
        %584 = vmatpush1.msra.mxu0 %v363
        %585 = vmatprep.subr.mxu0 %v368
        %586 = vmatpush1.msra.mxu0 %v367
        %587 = vmatprep.subr.mxu0 %v372
        %588 = vmatpush1.msra.mxu0 %v371
        %589 = vmatprep.mubr.f32.mxu0 %v244
        %590 = vmatmul.mubr.f32.gmra.mrb[0].mxu0 %v243
        %v591 = vpop.f32.mrb[0].mxu0
        %v592 = vadd.f32 %v508, %v591
        %v593 = vpop.f32.mrb[0].mxu0
        %v594 = vadd.f32 %v512, %v593
        %595 = vdwg.mxu0
        %596 = vmatprep.subr.mxu0 %v376
        %597 = vmatpush1.msra.mxu0 %v375
        %598 = vmatprep.subr.mxu0 %v380
        %599 = vmatpush1.msra.mxu0 %v379
        %600 = vmatprep.subr.mxu0 %v384
        %601 = vmatpush1.msra.mxu0 %v383
        %602 = vmatprep.subr.mxu0 %v388
        %603 = vmatpush1.msra.mxu0 %v387
        %604 = vmatprep.subr.mxu0 %v392
        %605 = vmatpush1.msra.mxu0 %v391
        %606 = vmatprep.subr.mxu0 %v396
        %607 = vmatpush1.msra.mxu0 %v395
        %608 = vmatprep.subr.mxu0 %v400
        %609 = vmatpush1.msra.mxu0 %v399
        %610 = vmatprep.subr.mxu0 %v404
        %611 = vmatpush1.msra.mxu0 %v403
        %612 = vmatprep.subr.mxu0 %v408
        %613 = vmatpush1.msra.mxu0 %v407
        %614 = vmatprep.subr.mxu0 %v412
        %615 = vmatpush1.msra.mxu0 %v411
        %616 = vmatprep.subr.mxu0 %v416
        %617 = vmatpush1.msra.mxu0 %v415
        %618 = vmatprep.subr.mxu0 %v420
        %619 = vmatpush1.msra.mxu0 %v419
        %620 = vmatprep.subr.mxu0 %v424
        %621 = vmatpush1.msra.mxu0 %v423
        %622 = vmatprep.subr.mxu0 %v428
        %623 = vmatpush1.msra.mxu0 %v427
        %624 = vmatprep.subr.mxu0 %v432
        %625 = vmatpush1.msra.mxu0 %v431
        %626 = vmatprep.subr.mxu0 %v436
        %627 = vmatpush1.msra.mxu0 %v435
        %628 = vmatprep.subr.mxu0 %v440
        %629 = vmatpush1.msra.mxu0 %v439
        %630 = vmatprep.subr.mxu0 %v444
        %631 = vmatpush1.msra.mxu0 %v443
        %632 = vmatprep.subr.mxu0 %v448
        %633 = vmatpush1.msra.mxu0 %v447
        %634 = vmatprep.subr.mxu0 %v452
        %635 = vmatpush1.msra.mxu0 %v451
        %636 = vmatprep.subr.mxu0 %v456
        %637 = vmatpush1.msra.mxu0 %v455
        %638 = vmatprep.subr.mxu0 %v460
        %639 = vmatpush1.msra.mxu0 %v459
        %640 = vmatprep.subr.mxu0 %v464
        %641 = vmatpush1.msra.mxu0 %v463
        %642 = vmatprep.subr.mxu0 %v468
        %643 = vmatpush1.msra.mxu0 %v467
        %644 = vmatprep.subr.mxu0 %v472
        %645 = vmatpush1.msra.mxu0 %v471
        %646 = vmatprep.subr.mxu0 %v476
        %647 = vmatpush1.msra.mxu0 %v475
        %648 = vmatprep.subr.mxu0 %v480
        %649 = vmatpush1.msra.mxu0 %v479
        %650 = vmatprep.subr.mxu0 %v484
        %651 = vmatpush1.msra.mxu0 %v483
        %652 = vmatprep.subr.mxu0 %v488
        %653 = vmatpush1.msra.mxu0 %v487
        %654 = vmatprep.subr.mxu0 %v492
        %655 = vmatpush1.msra.mxu0 %v491
        %656 = vmatprep.subr.mxu0 %v496
        %657 = vmatpush1.msra.mxu0 %v495
        %658 = vmatprep.subr.mxu0 %v500
        %659 = vmatpush1.msra.mxu0 %v499
        %660 = vmatprep.mubr.f32.mxu0 %v246
        %661 = vmatmul.mubr.f32.gmra.mrb[0].mxu0 %v245
        %v662 = vpop.f32.mrb[0].mxu0
        %v663 = vadd.f32 %v592, %v662
        %v664 = vpop.f32.mrb[0].mxu0
        %v665 = vadd.f32 %v594, %v664
        %666 = vdwg.mxu0
        %667 = vmatprep.subr.mxu0 %v250
        %668 = vmatpush1.msra.mxu0 %v249
        %669 = vmatprep.subr.mxu0 %v254
        %670 = vmatpush1.msra.mxu0 %v253
        %671 = vmatprep.subr.mxu0 %v258
        %672 = vmatpush1.msra.mxu0 %v257
        %673 = vmatprep.subr.mxu0 %v262
        %674 = vmatpush1.msra.mxu0 %v261
        %675 = vmatprep.subr.mxu0 %v266
        %676 = vmatpush1.msra.mxu0 %v265
        %677 = vmatprep.subr.mxu0 %v270
        %678 = vmatpush1.msra.mxu0 %v269
        %679 = vmatprep.subr.mxu0 %v274
        %680 = vmatpush1.msra.mxu0 %v273
        %681 = vmatprep.subr.mxu0 %v278
        %682 = vmatpush1.msra.mxu0 %v277
        %683 = vmatprep.subr.mxu0 %v282
        %684 = vmatpush1.msra.mxu0 %v281
        %685 = vmatprep.subr.mxu0 %v286
        %686 = vmatpush1.msra.mxu0 %v285
        %687 = vmatprep.subr.mxu0 %v290
        %688 = vmatpush1.msra.mxu0 %v289
        %689 = vmatprep.subr.mxu0 %v294
        %690 = vmatpush1.msra.mxu0 %v293
        %691 = vmatprep.subr.mxu0 %v298
        %692 = vmatpush1.msra.mxu0 %v297
        %693 = vmatprep.subr.mxu0 %v302
        %694 = vmatpush1.msra.mxu0 %v301
        %695 = vmatprep.subr.mxu0 %v306
        %696 = vmatpush1.msra.mxu0 %v305
        %697 = vmatprep.subr.mxu0 %v310
        %698 = vmatpush1.msra.mxu0 %v309
        %699 = vmatprep.subr.mxu0 %v314
        %700 = vmatpush1.msra.mxu0 %v313
        %701 = vmatprep.subr.mxu0 %v318
        %702 = vmatpush1.msra.mxu0 %v317
        %703 = vmatprep.subr.mxu0 %v322
        %704 = vmatpush1.msra.mxu0 %v321
        %705 = vmatprep.subr.mxu0 %v326
        %706 = vmatpush1.msra.mxu0 %v325
        %707 = vmatprep.subr.mxu0 %v330
        %708 = vmatpush1.msra.mxu0 %v329
        %709 = vmatprep.subr.mxu0 %v334
        %710 = vmatpush1.msra.mxu0 %v333
        %711 = vmatprep.subr.mxu0 %v338
        %712 = vmatpush1.msra.mxu0 %v337
        %713 = vmatprep.subr.mxu0 %v342
        %714 = vmatpush1.msra.mxu0 %v341
        %715 = vmatprep.subr.mxu0 %v346
        %716 = vmatpush1.msra.mxu0 %v345
        %717 = vmatprep.subr.mxu0 %v350
        %718 = vmatpush1.msra.mxu0 %v349
        %719 = vmatprep.subr.mxu0 %v354
        %720 = vmatpush1.msra.mxu0 %v353
        %721 = vmatprep.subr.mxu0 %v358
        %722 = vmatpush1.msra.mxu0 %v357
        %723 = vmatprep.subr.mxu0 %v362
        %724 = vmatpush1.msra.mxu0 %v361
        %725 = vmatprep.subr.mxu0 %v366
        %726 = vmatpush1.msra.mxu0 %v365
        %727 = vmatprep.subr.mxu0 %v370
        %728 = vmatpush1.msra.mxu0 %v369
        %729 = vmatprep.subr.mxu0 %v374
        %730 = vmatpush1.msra.mxu0 %v373
        %731 = vmatprep.mubr.f32.mxu0 %v244
        %732 = vmatmul.mubr.f32.gmra.mrb[0].mxu0 %v243
        %v733 = vpop.f32.mrb[0].mxu0
        %v734 = vadd.f32 %v516, %v733
        %v735 = vpop.f32.mrb[0].mxu0
        %v736 = vadd.f32 %v520, %v735
        %737 = vdwg.mxu0
        %738 = vmatprep.subr.mxu0 %v378
        %739 = vmatpush1.msra.mxu0 %v377
        %740 = vmatprep.subr.mxu0 %v382
        %741 = vmatpush1.msra.mxu0 %v381
        %742 = vmatprep.subr.mxu0 %v386
        %743 = vmatpush1.msra.mxu0 %v385
        %744 = vmatprep.subr.mxu0 %v390
        %745 = vmatpush1.msra.mxu0 %v389
        %746 = vmatprep.subr.mxu0 %v394
        %747 = vmatpush1.msra.mxu0 %v393
        %748 = vmatprep.subr.mxu0 %v398
        %749 = vmatpush1.msra.mxu0 %v397
        %750 = vmatprep.subr.mxu0 %v402
        %751 = vmatpush1.msra.mxu0 %v401
        %752 = vmatprep.subr.mxu0 %v406
        %753 = vmatpush1.msra.mxu0 %v405
        %754 = vmatprep.subr.mxu0 %v410
        %755 = vmatpush1.msra.mxu0 %v409
        %756 = vmatprep.subr.mxu0 %v414
        %757 = vmatpush1.msra.mxu0 %v413
        %758 = vmatprep.subr.mxu0 %v418
        %759 = vmatpush1.msra.mxu0 %v417
        %760 = vmatprep.subr.mxu0 %v422
        %761 = vmatpush1.msra.mxu0 %v421
        %762 = vmatprep.subr.mxu0 %v426
        %763 = vmatpush1.msra.mxu0 %v425
        %764 = vmatprep.subr.mxu0 %v430
        %765 = vmatpush1.msra.mxu0 %v429
        %766 = vmatprep.subr.mxu0 %v434
        %767 = vmatpush1.msra.mxu0 %v433
        %768 = vmatprep.subr.mxu0 %v438
        %769 = vmatpush1.msra.mxu0 %v437
        %770 = vmatprep.subr.mxu0 %v442
        %771 = vmatpush1.msra.mxu0 %v441
        %772 = vmatprep.subr.mxu0 %v446
        %773 = vmatpush1.msra.mxu0 %v445
        %774 = vmatprep.subr.mxu0 %v450
        %775 = vmatpush1.msra.mxu0 %v449
        %776 = vmatprep.subr.mxu0 %v454
        %777 = vmatpush1.msra.mxu0 %v453
        %778 = vmatprep.subr.mxu0 %v458
        %779 = vmatpush1.msra.mxu0 %v457
        %780 = vmatprep.subr.mxu0 %v462
        %781 = vmatpush1.msra.mxu0 %v461
        %782 = vmatprep.subr.mxu0 %v466
        %783 = vmatpush1.msra.mxu0 %v465
        %784 = vmatprep.subr.mxu0 %v470
        %785 = vmatpush1.msra.mxu0 %v469
        %786 = vmatprep.subr.mxu0 %v474
        %787 = vmatpush1.msra.mxu0 %v473
        %788 = vmatprep.subr.mxu0 %v478
        %789 = vmatpush1.msra.mxu0 %v477
        %790 = vmatprep.subr.mxu0 %v482
        %791 = vmatpush1.msra.mxu0 %v481
        %792 = vmatprep.subr.mxu0 %v486
        %793 = vmatpush1.msra.mxu0 %v485
        %794 = vmatprep.subr.mxu0 %v490
        %795 = vmatpush1.msra.mxu0 %v489
        %796 = vmatprep.subr.mxu0 %v494
        %797 = vmatpush1.msra.mxu0 %v493
        %798 = vmatprep.subr.mxu0 %v498
        %799 = vmatpush1.msra.mxu0 %v497
        %800 = vmatprep.subr.mxu0 %v502
        %801 = vmatpush1.msra.mxu0 %v501
        %802 = vmatprep.mubr.f32.mxu0 %v246
        %803 = vmatmul.mubr.f32.gmra.mrb[0].mxu0 %v245
        %v804 = vpop.f32.mrb[0].mxu0
        %v805 = vadd.f32 %v734, %v804
        %v806 = vpop.f32.mrb[0].mxu0
        %v807 = vadd.f32 %v736, %v806
        %808 = vdwg.mxu0
        %v809 = vmax.f32 %v663, 0.0
        %v810 = vmax.f32 %v665, 0.0
        %v811 = vmax.f32 %v805, 0.0
        %v812 = vmax.f32 %v807, 0.0
        %v813 = vld [vmem:[#allocation7] sm:$0xff]
        %v814 = vld [vmem:[#allocation7 + $0x8] sm:$0xff]
        %v815 = vld [vmem:[#allocation7 + $0x10] sm:$0xff]
        %v816 = vld [vmem:[#allocation7 + $0x18] sm:$0xff]
        %v817 = vld [vmem:[#allocation7 + $0x20] sm:$0xff]
        %v818 = vld [vmem:[#allocation7 + $0x28] sm:$0xff]
        %v819 = vld [vmem:[#allocation7 + $0x30] sm:$0xff]
        %v820 = vld [vmem:[#allocation7 + $0x38] sm:$0xff]
        %v821 = vld [vmem:[#allocation7 + $0x40] sm:$0xff]
        %v822 = vld [vmem:[#allocation7 + $0x48] sm:$0xff]
        %v823 = vld [vmem:[#allocation7 + $0x50] sm:$0xff]
        %v824 = vld [vmem:[#allocation7 + $0x58] sm:$0xff]
        %v825 = vld [vmem:[#allocation7 + $0x60] sm:$0xff]
        %v826 = vld [vmem:[#allocation7 + $0x68] sm:$0xff]
        %v827 = vld [vmem:[#allocation7 + $0x70] sm:$0xff]
        %v828 = vld [vmem:[#allocation7 + $0x78] sm:$0xff]
        %v829 = vld [vmem:[#allocation7 + $0x80] sm:$0xff]
        %v830 = vld [vmem:[#allocation7 + $0x88] sm:$0xff]
        %v831 = vld [vmem:[#allocation7 + $0x90] sm:$0xff]
        %v832 = vld [vmem:[#allocation7 + $0x98] sm:$0xff]
        %v833 = vld [vmem:[#allocation7 + $0xa0] sm:$0xff]
        %v834 = vld [vmem:[#allocation7 + $0xa8] sm:$0xff]
        %v835 = vld [vmem:[#allocation7 + $0xb0] sm:$0xff]
        %v836 = vld [vmem:[#allocation7 + $0xb8] sm:$0xff]
        %v837 = vld [vmem:[#allocation7 + $0xc0] sm:$0xff]
        %v838 = vld [vmem:[#allocation7 + $0xc8] sm:$0xff]
        %v839 = vld [vmem:[#allocation7 + $0xd0] sm:$0xff]
        %v840 = vld [vmem:[#allocation7 + $0xd8] sm:$0xff]
        %v841 = vld [vmem:[#allocation7 + $0xe0] sm:$0xff]
        %v842 = vld [vmem:[#allocation7 + $0xe8] sm:$0xff]
        %v843 = vld [vmem:[#allocation7 + $0xf0] sm:$0xff]
        %v844 = vld [vmem:[#allocation7 + $0xf8] sm:$0xff]
        %v845 = vld [vmem:[#allocation7 + $0x100] sm:$0xff]
        %v846 = vld [vmem:[#allocation7 + $0x108] sm:$0xff]
        %v847 = vld [vmem:[#allocation7 + $0x110] sm:$0xff]
        %v848 = vld [vmem:[#allocation7 + $0x118] sm:$0xff]
        %v849 = vld [vmem:[#allocation7 + $0x120] sm:$0xff]
        %v850 = vld [vmem:[#allocation7 + $0x128] sm:$0xff]
        %v851 = vld [vmem:[#allocation7 + $0x130] sm:$0xff]
        %v852 = vld [vmem:[#allocation7 + $0x138] sm:$0xff]
        %v853 = vld [vmem:[#allocation7 + $0x140] sm:$0xff]
        %v854 = vld [vmem:[#allocation7 + $0x148] sm:$0xff]
        %v855 = vld [vmem:[#allocation7 + $0x150] sm:$0xff]
        %v856 = vld [vmem:[#allocation7 + $0x158] sm:$0xff]
        %v857 = vld [vmem:[#allocation7 + $0x160] sm:$0xff]
        %v858 = vld [vmem:[#allocation7 + $0x168] sm:$0xff]
        %v859 = vld [vmem:[#allocation7 + $0x170] sm:$0xff]
        %v860 = vld [vmem:[#allocation7 + $0x178] sm:$0xff]
        %v861 = vld [vmem:[#allocation7 + $0x180] sm:$0xff]
        %v862 = vld [vmem:[#allocation7 + $0x188] sm:$0xff]
        %v863 = vld [vmem:[#allocation7 + $0x190] sm:$0xff]
        %v864 = vld [vmem:[#allocation7 + $0x198] sm:$0xff]
        %v865 = vld [vmem:[#allocation7 + $0x1a0] sm:$0xff]
        %v866 = vld [vmem:[#allocation7 + $0x1a8] sm:$0xff]
        %v867 = vld [vmem:[#allocation7 + $0x1b0] sm:$0xff]
        %v868 = vld [vmem:[#allocation7 + $0x1b8] sm:$0xff]
        %v869 = vld [vmem:[#allocation7 + $0x1c0] sm:$0xff]
        %v870 = vld [vmem:[#allocation7 + $0x1c8] sm:$0xff]
        %v871 = vld [vmem:[#allocation7 + $0x1d0] sm:$0xff]
        %v872 = vld [vmem:[#allocation7 + $0x1d8] sm:$0xff]
        %v873 = vld [vmem:[#allocation7 + $0x1e0] sm:$0xff]
        %v874 = vld [vmem:[#allocation7 + $0x1e8] sm:$0xff]
        %v875 = vld [vmem:[#allocation7 + $0x1f0] sm:$0xff]
        %v876 = vld [vmem:[#allocation7 + $0x1f8] sm:$0xff]
        %v877 = vld [vmem:[#allocation7 + $0x200] sm:$0xff]
        %v878 = vld [vmem:[#allocation7 + $0x208] sm:$0xff]
        %v879 = vld [vmem:[#allocation7 + $0x210] sm:$0xff]
        %v880 = vld [vmem:[#allocation7 + $0x218] sm:$0xff]
        %v881 = vld [vmem:[#allocation7 + $0x220] sm:$0xff]
        %v882 = vld [vmem:[#allocation7 + $0x228] sm:$0xff]
        %v883 = vld [vmem:[#allocation7 + $0x230] sm:$0xff]
        %v884 = vld [vmem:[#allocation7 + $0x238] sm:$0xff]
        %v885 = vld [vmem:[#allocation7 + $0x240] sm:$0xff]
        %v886 = vld [vmem:[#allocation7 + $0x248] sm:$0xff]
        %v887 = vld [vmem:[#allocation7 + $0x250] sm:$0xff]
        %v888 = vld [vmem:[#allocation7 + $0x258] sm:$0xff]
        %v889 = vld [vmem:[#allocation7 + $0x260] sm:$0xff]
        %v890 = vld [vmem:[#allocation7 + $0x268] sm:$0xff]
        %v891 = vld [vmem:[#allocation7 + $0x270] sm:$0xff]
        %v892 = vld [vmem:[#allocation7 + $0x278] sm:$0xff]
        %v893 = vld [vmem:[#allocation7 + $0x280] sm:$0xff]
        %v894 = vld [vmem:[#allocation7 + $0x288] sm:$0xff]
        %v895 = vld [vmem:[#allocation7 + $0x290] sm:$0xff]
        %v896 = vld [vmem:[#allocation7 + $0x298] sm:$0xff]
        %v897 = vld [vmem:[#allocation7 + $0x2a0] sm:$0xff]
        %v898 = vld [vmem:[#allocation7 + $0x2a8] sm:$0xff]
        %v899 = vld [vmem:[#allocation7 + $0x2b0] sm:$0xff]
        %v900 = vld [vmem:[#allocation7 + $0x2b8] sm:$0xff]
        %v901 = vld [vmem:[#allocation7 + $0x2c0] sm:$0xff]
        %v902 = vld [vmem:[#allocation7 + $0x2c8] sm:$0xff]
        %v903 = vld [vmem:[#allocation7 + $0x2d0] sm:$0xff]
        %v904 = vld [vmem:[#allocation7 + $0x2d8] sm:$0xff]
        %v905 = vld [vmem:[#allocation7 + $0x2e0] sm:$0xff]
        %v906 = vld [vmem:[#allocation7 + $0x2e8] sm:$0xff]
        %v907 = vld [vmem:[#allocation7 + $0x2f0] sm:$0xff]
        %v908 = vld [vmem:[#allocation7 + $0x2f8] sm:$0xff]
        %v909 = vld [vmem:[#allocation7 + $0x300] sm:$0xff]
        %v910 = vld [vmem:[#allocation7 + $0x308] sm:$0xff]
        %v911 = vld [vmem:[#allocation7 + $0x310] sm:$0xff]
        %v912 = vld [vmem:[#allocation7 + $0x318] sm:$0xff]
        %v913 = vld [vmem:[#allocation7 + $0x320] sm:$0xff]
        %v914 = vld [vmem:[#allocation7 + $0x328] sm:$0xff]
        %v915 = vld [vmem:[#allocation7 + $0x330] sm:$0xff]
        %v916 = vld [vmem:[#allocation7 + $0x338] sm:$0xff]
        %v917 = vld [vmem:[#allocation7 + $0x340] sm:$0xff]
        %v918 = vld [vmem:[#allocation7 + $0x348] sm:$0xff]
        %v919 = vld [vmem:[#allocation7 + $0x350] sm:$0xff]
        %v920 = vld [vmem:[#allocation7 + $0x358] sm:$0xff]
        %v921 = vld [vmem:[#allocation7 + $0x360] sm:$0xff]
        %v922 = vld [vmem:[#allocation7 + $0x368] sm:$0xff]
        %v923 = vld [vmem:[#allocation7 + $0x370] sm:$0xff]
        %v924 = vld [vmem:[#allocation7 + $0x378] sm:$0xff]
        %v925 = vld [vmem:[#allocation7 + $0x380] sm:$0xff]
        %v926 = vld [vmem:[#allocation7 + $0x388] sm:$0xff]
        %v927 = vld [vmem:[#allocation7 + $0x390] sm:$0xff]
        %v928 = vld [vmem:[#allocation7 + $0x398] sm:$0xff]
        %v929 = vld [vmem:[#allocation7 + $0x3a0] sm:$0xff]
        %v930 = vld [vmem:[#allocation7 + $0x3a8] sm:$0xff]
        %v931 = vld [vmem:[#allocation7 + $0x3b0] sm:$0xff]
        %v932 = vld [vmem:[#allocation7 + $0x3b8] sm:$0xff]
        %v933 = vld [vmem:[#allocation7 + $0x3c0] sm:$0xff]
        %v934 = vld [vmem:[#allocation7 + $0x3c8] sm:$0xff]
        %v935 = vld [vmem:[#allocation7 + $0x3d0] sm:$0xff]
        %v936 = vld [vmem:[#allocation7 + $0x3d8] sm:$0xff]
        %v937 = vld [vmem:[#allocation7 + $0x3e0] sm:$0xff]
        %v938 = vld [vmem:[#allocation7 + $0x3e8] sm:$0xff]
        %v939 = vld [vmem:[#allocation7 + $0x3f0] sm:$0xff]
        %v940 = vld [vmem:[#allocation7 + $0x3f8] sm:$0xff]
        %v941 = vld [vmem:[#allocation7 + $0x400] sm:$0xff]
        %v942 = vld [vmem:[#allocation7 + $0x408] sm:$0xff]
        %v943 = vld [vmem:[#allocation7 + $0x410] sm:$0xff]
        %v944 = vld [vmem:[#allocation7 + $0x418] sm:$0xff]
        %v945 = vld [vmem:[#allocation7 + $0x420] sm:$0xff]
        %v946 = vld [vmem:[#allocation7 + $0x428] sm:$0xff]
        %v947 = vld [vmem:[#allocation7 + $0x430] sm:$0xff]
        %v948 = vld [vmem:[#allocation7 + $0x438] sm:$0xff]
        %v949 = vld [vmem:[#allocation7 + $0x440] sm:$0xff]
        %v950 = vld [vmem:[#allocation7 + $0x448] sm:$0xff]
        %v951 = vld [vmem:[#allocation7 + $0x450] sm:$0xff]
        %v952 = vld [vmem:[#allocation7 + $0x458] sm:$0xff]
        %v953 = vld [vmem:[#allocation7 + $0x460] sm:$0xff]
        %v954 = vld [vmem:[#allocation7 + $0x468] sm:$0xff]
        %v955 = vld [vmem:[#allocation7 + $0x470] sm:$0xff]
        %v956 = vld [vmem:[#allocation7 + $0x478] sm:$0xff]
        %v957 = vld [vmem:[#allocation7 + $0x480] sm:$0xff]
        %v958 = vld [vmem:[#allocation7 + $0x488] sm:$0xff]
        %v959 = vld [vmem:[#allocation7 + $0x490] sm:$0xff]
        %v960 = vld [vmem:[#allocation7 + $0x498] sm:$0xff]
        %v961 = vld [vmem:[#allocation7 + $0x4a0] sm:$0xff]
        %v962 = vld [vmem:[#allocation7 + $0x4a8] sm:$0xff]
        %v963 = vld [vmem:[#allocation7 + $0x4b0] sm:$0xff]
        %v964 = vld [vmem:[#allocation7 + $0x4b8] sm:$0xff]
        %v965 = vld [vmem:[#allocation7 + $0x4c0] sm:$0xff]
        %v966 = vld [vmem:[#allocation7 + $0x4c8] sm:$0xff]
        %v967 = vld [vmem:[#allocation7 + $0x4d0] sm:$0xff]
        %v968 = vld [vmem:[#allocation7 + $0x4d8] sm:$0xff]
        %v969 = vld [vmem:[#allocation7 + $0x4e0] sm:$0xff]
        %v970 = vld [vmem:[#allocation7 + $0x4e8] sm:$0xff]
        %v971 = vld [vmem:[#allocation7 + $0x4f0] sm:$0xff]
        %v972 = vld [vmem:[#allocation7 + $0x4f8] sm:$0xff]
        %v973 = vld [vmem:[#allocation7 + $0x500] sm:$0xff]
        %v974 = vld [vmem:[#allocation7 + $0x508] sm:$0xff]
        %v975 = vld [vmem:[#allocation7 + $0x510] sm:$0xff]
        %v976 = vld [vmem:[#allocation7 + $0x518] sm:$0xff]
        %v977 = vld [vmem:[#allocation7 + $0x520] sm:$0xff]
        %v978 = vld [vmem:[#allocation7 + $0x528] sm:$0xff]
        %v979 = vld [vmem:[#allocation7 + $0x530] sm:$0xff]
        %v980 = vld [vmem:[#allocation7 + $0x538] sm:$0xff]
        %v981 = vld [vmem:[#allocation7 + $0x540] sm:$0xff]
        %v982 = vld [vmem:[#allocation7 + $0x548] sm:$0xff]
        %v983 = vld [vmem:[#allocation7 + $0x550] sm:$0xff]
        %v984 = vld [vmem:[#allocation7 + $0x558] sm:$0xff]
        %v985 = vld [vmem:[#allocation7 + $0x560] sm:$0xff]
        %v986 = vld [vmem:[#allocation7 + $0x568] sm:$0xff]
        %v987 = vld [vmem:[#allocation7 + $0x570] sm:$0xff]
        %v988 = vld [vmem:[#allocation7 + $0x578] sm:$0xff]
        %v989 = vld [vmem:[#allocation7 + $0x580] sm:$0xff]
        %v990 = vld [vmem:[#allocation7 + $0x588] sm:$0xff]
        %v991 = vld [vmem:[#allocation7 + $0x590] sm:$0xff]
        %v992 = vld [vmem:[#allocation7 + $0x598] sm:$0xff]
        %v993 = vld [vmem:[#allocation7 + $0x5a0] sm:$0xff]
        %v994 = vld [vmem:[#allocation7 + $0x5a8] sm:$0xff]
        %v995 = vld [vmem:[#allocation7 + $0x5b0] sm:$0xff]
        %v996 = vld [vmem:[#allocation7 + $0x5b8] sm:$0xff]
        %v997 = vld [vmem:[#allocation7 + $0x5c0] sm:$0xff]
        %v998 = vld [vmem:[#allocation7 + $0x5c8] sm:$0xff]
        %v999 = vld [vmem:[#allocation7 + $0x5d0] sm:$0xff]
        %v1000 = vld [vmem:[#allocation7 + $0x5d8] sm:$0xff]
        %v1001 = vld [vmem:[#allocation7 + $0x5e0] sm:$0xff]
        %v1002 = vld [vmem:[#allocation7 + $0x5e8] sm:$0xff]
        %v1003 = vld [vmem:[#allocation7 + $0x5f0] sm:$0xff]
        %v1004 = vld [vmem:[#allocation7 + $0x5f8] sm:$0xff]
        %v1005 = vld [vmem:[#allocation7 + $0x600] sm:$0xff]
        %v1006 = vld [vmem:[#allocation7 + $0x608] sm:$0xff]
        %v1007 = vld [vmem:[#allocation7 + $0x610] sm:$0xff]
        %v1008 = vld [vmem:[#allocation7 + $0x618] sm:$0xff]
        %v1009 = vld [vmem:[#allocation7 + $0x620] sm:$0xff]
        %v1010 = vld [vmem:[#allocation7 + $0x628] sm:$0xff]
        %v1011 = vld [vmem:[#allocation7 + $0x630] sm:$0xff]
        %v1012 = vld [vmem:[#allocation7 + $0x638] sm:$0xff]
        %v1013 = vld [vmem:[#allocation7 + $0x640] sm:$0xff]
        %v1014 = vld [vmem:[#allocation7 + $0x648] sm:$0xff]
        %v1015 = vld [vmem:[#allocation7 + $0x650] sm:$0xff]
        %v1016 = vld [vmem:[#allocation7 + $0x658] sm:$0xff]
        %v1017 = vld [vmem:[#allocation7 + $0x660] sm:$0xff]
        %v1018 = vld [vmem:[#allocation7 + $0x668] sm:$0xff]
        %v1019 = vld [vmem:[#allocation7 + $0x670] sm:$0xff]
        %v1020 = vld [vmem:[#allocation7 + $0x678] sm:$0xff]
        %v1021 = vld [vmem:[#allocation7 + $0x680] sm:$0xff]
        %v1022 = vld [vmem:[#allocation7 + $0x688] sm:$0xff]
        %v1023 = vld [vmem:[#allocation7 + $0x690] sm:$0xff]
        %v1024 = vld [vmem:[#allocation7 + $0x698] sm:$0xff]
        %v1025 = vld [vmem:[#allocation7 + $0x6a0] sm:$0xff]
        %v1026 = vld [vmem:[#allocation7 + $0x6a8] sm:$0xff]
        %v1027 = vld [vmem:[#allocation7 + $0x6b0] sm:$0xff]
        %v1028 = vld [vmem:[#allocation7 + $0x6b8] sm:$0xff]
        %v1029 = vld [vmem:[#allocation7 + $0x6c0] sm:$0xff]
        %v1030 = vld [vmem:[#allocation7 + $0x6c8] sm:$0xff]
        %v1031 = vld [vmem:[#allocation7 + $0x6d0] sm:$0xff]
        %v1032 = vld [vmem:[#allocation7 + $0x6d8] sm:$0xff]
        %v1033 = vld [vmem:[#allocation7 + $0x6e0] sm:$0xff]
        %v1034 = vld [vmem:[#allocation7 + $0x6e8] sm:$0xff]
        %v1035 = vld [vmem:[#allocation7 + $0x6f0] sm:$0xff]
        %v1036 = vld [vmem:[#allocation7 + $0x6f8] sm:$0xff]
        %v1037 = vld [vmem:[#allocation7 + $0x700] sm:$0xff]
        %v1038 = vld [vmem:[#allocation7 + $0x708] sm:$0xff]
        %v1039 = vld [vmem:[#allocation7 + $0x710] sm:$0xff]
        %v1040 = vld [vmem:[#allocation7 + $0x718] sm:$0xff]
        %v1041 = vld [vmem:[#allocation7 + $0x720] sm:$0xff]
        %v1042 = vld [vmem:[#allocation7 + $0x728] sm:$0xff]
        %v1043 = vld [vmem:[#allocation7 + $0x730] sm:$0xff]
        %v1044 = vld [vmem:[#allocation7 + $0x738] sm:$0xff]
        %v1045 = vld [vmem:[#allocation7 + $0x740] sm:$0xff]
        %v1046 = vld [vmem:[#allocation7 + $0x748] sm:$0xff]
        %v1047 = vld [vmem:[#allocation7 + $0x750] sm:$0xff]
        %v1048 = vld [vmem:[#allocation7 + $0x758] sm:$0xff]
        %v1049 = vld [vmem:[#allocation7 + $0x760] sm:$0xff]
        %v1050 = vld [vmem:[#allocation7 + $0x768] sm:$0xff]
        %v1051 = vld [vmem:[#allocation7 + $0x770] sm:$0xff]
        %v1052 = vld [vmem:[#allocation7 + $0x778] sm:$0xff]
        %v1053 = vld [vmem:[#allocation7 + $0x780] sm:$0xff]
        %v1054 = vld [vmem:[#allocation7 + $0x788] sm:$0xff]
        %v1055 = vld [vmem:[#allocation7 + $0x790] sm:$0xff]
        %v1056 = vld [vmem:[#allocation7 + $0x798] sm:$0xff]
        %v1057 = vld [vmem:[#allocation7 + $0x7a0] sm:$0xff]
        %v1058 = vld [vmem:[#allocation7 + $0x7a8] sm:$0xff]
        %v1059 = vld [vmem:[#allocation7 + $0x7b0] sm:$0xff]
        %v1060 = vld [vmem:[#allocation7 + $0x7b8] sm:$0xff]
        %v1061 = vld [vmem:[#allocation7 + $0x7c0] sm:$0xff]
        %v1062 = vld [vmem:[#allocation7 + $0x7c8] sm:$0xff]
        %v1063 = vld [vmem:[#allocation7 + $0x7d0] sm:$0xff]
        %v1064 = vld [vmem:[#allocation7 + $0x7d8] sm:$0xff]
        %v1065 = vld [vmem:[#allocation7 + $0x7e0] sm:$0xff]
        %v1066 = vld [vmem:[#allocation7 + $0x7e8] sm:$0xff]
        %v1067 = vld [vmem:[#allocation7 + $0x7f0] sm:$0xff]
        %v1068 = vld [vmem:[#allocation7 + $0x7f8] sm:$0xff]
        %1069 = vmatprep.subr.mxu0 %v814
        %1070 = vmatpush1.msra.mxu0 %v813
        %1071 = vmatprep.subr.mxu0 %v818
        %1072 = vmatpush1.msra.mxu0 %v817
        %1073 = vmatprep.subr.mxu0 %v822
        %1074 = vmatpush1.msra.mxu0 %v821
        %1075 = vmatprep.subr.mxu0 %v826
        %1076 = vmatpush1.msra.mxu0 %v825
        %1077 = vmatprep.subr.mxu0 %v830
        %1078 = vmatpush1.msra.mxu0 %v829
        %1079 = vmatprep.subr.mxu0 %v834
        %1080 = vmatpush1.msra.mxu0 %v833
        %1081 = vmatprep.subr.mxu0 %v838
        %1082 = vmatpush1.msra.mxu0 %v837
        %1083 = vmatprep.subr.mxu0 %v842
        %1084 = vmatpush1.msra.mxu0 %v841
        %1085 = vmatprep.subr.mxu0 %v846
        %1086 = vmatpush1.msra.mxu0 %v845
        %1087 = vmatprep.subr.mxu0 %v850
        %1088 = vmatpush1.msra.mxu0 %v849
        %1089 = vmatprep.subr.mxu0 %v854
        %1090 = vmatpush1.msra.mxu0 %v853
        %1091 = vmatprep.subr.mxu0 %v858
        %1092 = vmatpush1.msra.mxu0 %v857
        %1093 = vmatprep.subr.mxu0 %v862
        %1094 = vmatpush1.msra.mxu0 %v861
        %1095 = vmatprep.subr.mxu0 %v866
        %1096 = vmatpush1.msra.mxu0 %v865
        %1097 = vmatprep.subr.mxu0 %v870
        %1098 = vmatpush1.msra.mxu0 %v869
        %1099 = vmatprep.subr.mxu0 %v874
        %1100 = vmatpush1.msra.mxu0 %v873
        %1101 = vmatprep.subr.mxu0 %v878
        %1102 = vmatpush1.msra.mxu0 %v877
        %1103 = vmatprep.subr.mxu0 %v882
        %1104 = vmatpush1.msra.mxu0 %v881
        %1105 = vmatprep.subr.mxu0 %v886
        %1106 = vmatpush1.msra.mxu0 %v885
        %1107 = vmatprep.subr.mxu0 %v890
        %1108 = vmatpush1.msra.mxu0 %v889
        %1109 = vmatprep.subr.mxu0 %v894
        %1110 = vmatpush1.msra.mxu0 %v893
        %1111 = vmatprep.subr.mxu0 %v898
        %1112 = vmatpush1.msra.mxu0 %v897
        %1113 = vmatprep.subr.mxu0 %v902
        %1114 = vmatpush1.msra.mxu0 %v901
        %1115 = vmatprep.subr.mxu0 %v906
        %1116 = vmatpush1.msra.mxu0 %v905
        %1117 = vmatprep.subr.mxu0 %v910
        %1118 = vmatpush1.msra.mxu0 %v909
        %1119 = vmatprep.subr.mxu0 %v914
        %1120 = vmatpush1.msra.mxu0 %v913
        %1121 = vmatprep.subr.mxu0 %v918
        %1122 = vmatpush1.msra.mxu0 %v917
        %1123 = vmatprep.subr.mxu0 %v922
        %1124 = vmatpush1.msra.mxu0 %v921
        %1125 = vmatprep.subr.mxu0 %v926
        %1126 = vmatpush1.msra.mxu0 %v925
        %1127 = vmatprep.subr.mxu0 %v930
        %1128 = vmatpush1.msra.mxu0 %v929
        %1129 = vmatprep.subr.mxu0 %v934
        %1130 = vmatpush1.msra.mxu0 %v933
        %1131 = vmatprep.subr.mxu0 %v938
        %1132 = vmatpush1.msra.mxu0 %v937
        %1133 = vmatprep.mubr.f32.mxu0 %v810
        %1134 = vmatmul.mubr.f32.gmra.mrb[0].mxu0 %v809
        %v1135 = vpop.f32.mrb[0].mxu0
        %v1136 = vadd.f32 0.0, %v1135
        %v1137 = vpop.f32.mrb[0].mxu0
        %v1138 = vadd.f32 0.0, %v1137
        %1139 = vdwg.mxu0
        %1140 = vmatprep.subr.mxu0 %v942
        %1141 = vmatpush1.msra.mxu0 %v941
        %1142 = vmatprep.subr.mxu0 %v946
        %1143 = vmatpush1.msra.mxu0 %v945
        %1144 = vmatprep.subr.mxu0 %v950
        %1145 = vmatpush1.msra.mxu0 %v949
        %1146 = vmatprep.subr.mxu0 %v954
        %1147 = vmatpush1.msra.mxu0 %v953
        %1148 = vmatprep.subr.mxu0 %v958
        %1149 = vmatpush1.msra.mxu0 %v957
        %1150 = vmatprep.subr.mxu0 %v962
        %1151 = vmatpush1.msra.mxu0 %v961
        %1152 = vmatprep.subr.mxu0 %v966
        %1153 = vmatpush1.msra.mxu0 %v965
        %1154 = vmatprep.subr.mxu0 %v970
        %1155 = vmatpush1.msra.mxu0 %v969
        %1156 = vmatprep.subr.mxu0 %v974
        %1157 = vmatpush1.msra.mxu0 %v973
        %1158 = vmatprep.subr.mxu0 %v978
        %1159 = vmatpush1.msra.mxu0 %v977
        %1160 = vmatprep.subr.mxu0 %v982
        %1161 = vmatpush1.msra.mxu0 %v981
        %1162 = vmatprep.subr.mxu0 %v986
        %1163 = vmatpush1.msra.mxu0 %v985
        %1164 = vmatprep.subr.mxu0 %v990
        %1165 = vmatpush1.msra.mxu0 %v989
        %1166 = vmatprep.subr.mxu0 %v994
        %1167 = vmatpush1.msra.mxu0 %v993
        %1168 = vmatprep.subr.mxu0 %v998
        %1169 = vmatpush1.msra.mxu0 %v997
        %1170 = vmatprep.subr.mxu0 %v1002
        %1171 = vmatpush1.msra.mxu0 %v1001
        %1172 = vmatprep.subr.mxu0 %v1006
        %1173 = vmatpush1.msra.mxu0 %v1005
        %1174 = vmatprep.subr.mxu0 %v1010
        %1175 = vmatpush1.msra.mxu0 %v1009
        %1176 = vmatprep.subr.mxu0 %v1014
        %1177 = vmatpush1.msra.mxu0 %v1013
        %1178 = vmatprep.subr.mxu0 %v1018
        %1179 = vmatpush1.msra.mxu0 %v1017
        %1180 = vmatprep.subr.mxu0 %v1022
        %1181 = vmatpush1.msra.mxu0 %v1021
        %1182 = vmatprep.subr.mxu0 %v1026
        %1183 = vmatpush1.msra.mxu0 %v1025
        %1184 = vmatprep.subr.mxu0 %v1030
        %1185 = vmatpush1.msra.mxu0 %v1029
        %1186 = vmatprep.subr.mxu0 %v1034
        %1187 = vmatpush1.msra.mxu0 %v1033
        %1188 = vmatprep.subr.mxu0 %v1038
        %1189 = vmatpush1.msra.mxu0 %v1037
        %1190 = vmatprep.subr.mxu0 %v1042
        %1191 = vmatpush1.msra.mxu0 %v1041
        %1192 = vmatprep.subr.mxu0 %v1046
        %1193 = vmatpush1.msra.mxu0 %v1045
        %1194 = vmatprep.subr.mxu0 %v1050
        %1195 = vmatpush1.msra.mxu0 %v1049
        %1196 = vmatprep.subr.mxu0 %v1054
        %1197 = vmatpush1.msra.mxu0 %v1053
        %1198 = vmatprep.subr.mxu0 %v1058
        %1199 = vmatpush1.msra.mxu0 %v1057
        %1200 = vmatprep.subr.mxu0 %v1062
        %1201 = vmatpush1.msra.mxu0 %v1061
        %1202 = vmatprep.subr.mxu0 %v1066
        %1203 = vmatpush1.msra.mxu0 %v1065
        %1204 = vmatprep.mubr.f32.mxu0 %v812
        %1205 = vmatmul.mubr.f32.gmra.mrb[0].mxu0 %v811
        %v1206 = vpop.f32.mrb[0].mxu0
        %v1207 = vadd.f32 %v1136, %v1206
        %v1208 = vpop.f32.mrb[0].mxu0
        %v1209 = vadd.f32 %v1138, %v1208
        %1210 = vdwg.mxu0
        %1211 = vmatprep.subr.mxu0 %v816
        %1212 = vmatpush1.msra.mxu0 %v815
        %1213 = vmatprep.subr.mxu0 %v820
        %1214 = vmatpush1.msra.mxu0 %v819
        %1215 = vmatprep.subr.mxu0 %v824
        %1216 = vmatpush1.msra.mxu0 %v823
        %1217 = vmatprep.subr.mxu0 %v828
        %1218 = vmatpush1.msra.mxu0 %v827
        %1219 = vmatprep.subr.mxu0 %v832
        %1220 = vmatpush1.msra.mxu0 %v831
        %1221 = vmatprep.subr.mxu0 %v836
        %1222 = vmatpush1.msra.mxu0 %v835
        %1223 = vmatprep.subr.mxu0 %v840
        %1224 = vmatpush1.msra.mxu0 %v839
        %1225 = vmatprep.subr.mxu0 %v844
        %1226 = vmatpush1.msra.mxu0 %v843
        %1227 = vmatprep.subr.mxu0 %v848
        %1228 = vmatpush1.msra.mxu0 %v847
        %1229 = vmatprep.subr.mxu0 %v852
        %1230 = vmatpush1.msra.mxu0 %v851
        %1231 = vmatprep.subr.mxu0 %v856
        %1232 = vmatpush1.msra.mxu0 %v855
        %1233 = vmatprep.subr.mxu0 %v860
        %1234 = vmatpush1.msra.mxu0 %v859
        %1235 = vmatprep.subr.mxu0 %v864
        %1236 = vmatpush1.msra.mxu0 %v863
        %1237 = vmatprep.subr.mxu0 %v868
        %1238 = vmatpush1.msra.mxu0 %v867
        %1239 = vmatprep.subr.mxu0 %v872
        %1240 = vmatpush1.msra.mxu0 %v871
        %1241 = vmatprep.subr.mxu0 %v876
        %1242 = vmatpush1.msra.mxu0 %v875
        %1243 = vmatprep.subr.mxu0 %v880
        %1244 = vmatpush1.msra.mxu0 %v879
        %1245 = vmatprep.subr.mxu0 %v884
        %1246 = vmatpush1.msra.mxu0 %v883
        %1247 = vmatprep.subr.mxu0 %v888
        %1248 = vmatpush1.msra.mxu0 %v887
        %1249 = vmatprep.subr.mxu0 %v892
        %1250 = vmatpush1.msra.mxu0 %v891
        %1251 = vmatprep.subr.mxu0 %v896
        %1252 = vmatpush1.msra.mxu0 %v895
        %1253 = vmatprep.subr.mxu0 %v900
        %1254 = vmatpush1.msra.mxu0 %v899
        %1255 = vmatprep.subr.mxu0 %v904
        %1256 = vmatpush1.msra.mxu0 %v903
        %1257 = vmatprep.subr.mxu0 %v908
        %1258 = vmatpush1.msra.mxu0 %v907
        %1259 = vmatprep.subr.mxu0 %v912
        %1260 = vmatpush1.msra.mxu0 %v911
        %1261 = vmatprep.subr.mxu0 %v916
        %1262 = vmatpush1.msra.mxu0 %v915
        %1263 = vmatprep.subr.mxu0 %v920
        %1264 = vmatpush1.msra.mxu0 %v919
        %1265 = vmatprep.subr.mxu0 %v924
        %1266 = vmatpush1.msra.mxu0 %v923
        %1267 = vmatprep.subr.mxu0 %v928
        %1268 = vmatpush1.msra.mxu0 %v927
        %1269 = vmatprep.subr.mxu0 %v932
        %1270 = vmatpush1.msra.mxu0 %v931
        %1271 = vmatprep.subr.mxu0 %v936
        %1272 = vmatpush1.msra.mxu0 %v935
        %1273 = vmatprep.subr.mxu0 %v940
        %1274 = vmatpush1.msra.mxu0 %v939
        %1275 = vmatprep.mubr.f32.mxu0 %v810
        %1276 = vmatmul.mubr.f32.gmra.mrb[0].mxu0 %v809
        %v1277 = vpop.f32.mrb[0].mxu0
        %v1278 = vadd.f32 0.0, %v1277
        %v1279 = vpop.f32.mrb[0].mxu0
        %v1280 = vadd.f32 0.0, %v1279
        %1281 = vdwg.mxu0
        %1282 = vmatprep.subr.mxu0 %v944
        %1283 = vmatpush1.msra.mxu0 %v943
        %1284 = vmatprep.subr.mxu0 %v948
        %1285 = vmatpush1.msra.mxu0 %v947
        %1286 = vmatprep.subr.mxu0 %v952
        %1287 = vmatpush1.msra.mxu0 %v951
        %1288 = vmatprep.subr.mxu0 %v956
        %1289 = vmatpush1.msra.mxu0 %v955
        %1290 = vmatprep.subr.mxu0 %v960
        %1291 = vmatpush1.msra.mxu0 %v959
        %1292 = vmatprep.subr.mxu0 %v964
        %1293 = vmatpush1.msra.mxu0 %v963
        %1294 = vmatprep.subr.mxu0 %v968
        %1295 = vmatpush1.msra.mxu0 %v967
        %1296 = vmatprep.subr.mxu0 %v972
        %1297 = vmatpush1.msra.mxu0 %v971
        %1298 = vmatprep.subr.mxu0 %v976
        %1299 = vmatpush1.msra.mxu0 %v975
        %1300 = vmatprep.subr.mxu0 %v980
        %1301 = vmatpush1.msra.mxu0 %v979
        %1302 = vmatprep.subr.mxu0 %v984
        %1303 = vmatpush1.msra.mxu0 %v983
        %1304 = vmatprep.subr.mxu0 %v988
        %1305 = vmatpush1.msra.mxu0 %v987
        %1306 = vmatprep.subr.mxu0 %v992
        %1307 = vmatpush1.msra.mxu0 %v991
        %1308 = vmatprep.subr.mxu0 %v996
        %1309 = vmatpush1.msra.mxu0 %v995
        %1310 = vmatprep.subr.mxu0 %v1000
        %1311 = vmatpush1.msra.mxu0 %v999
        %1312 = vmatprep.subr.mxu0 %v1004
        %1313 = vmatpush1.msra.mxu0 %v1003
        %1314 = vmatprep.subr.mxu0 %v1008
        %1315 = vmatpush1.msra.mxu0 %v1007
        %1316 = vmatprep.subr.mxu0 %v1012
        %1317 = vmatpush1.msra.mxu0 %v1011
        %1318 = vmatprep.subr.mxu0 %v1016
        %1319 = vmatpush1.msra.mxu0 %v1015
        %1320 = vmatprep.subr.mxu0 %v1020
        %1321 = vmatpush1.msra.mxu0 %v1019
        %1322 = vmatprep.subr.mxu0 %v1024
        %1323 = vmatpush1.msra.mxu0 %v1023
        %1324 = vmatprep.subr.mxu0 %v1028
        %1325 = vmatpush1.msra.mxu0 %v1027
        %1326 = vmatprep.subr.mxu0 %v1032
        %1327 = vmatpush1.msra.mxu0 %v1031
        %1328 = vmatprep.subr.mxu0 %v1036
        %1329 = vmatpush1.msra.mxu0 %v1035
        %1330 = vmatprep.subr.mxu0 %v1040
        %1331 = vmatpush1.msra.mxu0 %v1039
        %1332 = vmatprep.subr.mxu0 %v1044
        %1333 = vmatpush1.msra.mxu0 %v1043
        %1334 = vmatprep.subr.mxu0 %v1048
        %1335 = vmatpush1.msra.mxu0 %v1047
        %1336 = vmatprep.subr.mxu0 %v1052
        %1337 = vmatpush1.msra.mxu0 %v1051
        %1338 = vmatprep.subr.mxu0 %v1056
        %1339 = vmatpush1.msra.mxu0 %v1055
        %1340 = vmatprep.subr.mxu0 %v1060
        %1341 = vmatpush1.msra.mxu0 %v1059
        %1342 = vmatprep.subr.mxu0 %v1064
        %1343 = vmatpush1.msra.mxu0 %v1063
        %1344 = vmatprep.subr.mxu0 %v1068
        %1345 = vmatpush1.msra.mxu0 %v1067
        %1346 = vmatprep.mubr.f32.mxu0 %v812
        %1347 = vmatmul.mubr.f32.gmra.mrb[0].mxu0 %v811
        %v1348 = vpop.f32.mrb[0].mxu0
        %v1349 = vadd.f32 %v1278, %v1348
        %v1350 = vpop.f32.mrb[0].mxu0
        %v1351 = vadd.f32 %v1280, %v1350
        %1352 = vdwg.mxu0
        %1353 = vst [vmem:[%s242] sm:$0xff] %v1207
        %1354 = vst [vmem:[%s242 + $0x8] sm:$0xff] %v1209
        %1355 = vst [vmem:[%s242 + $0x10] sm:$0xff] %v1349
        %1356 = vst [vmem:[%s242 + $0x18] sm:$0xff] %v1351
        %s1357 = sand.u32 %s119, 1
        %s1358 = scalar_lea.sflag [#allocation4], %s1357
        %s1359 = sand.u32 %s119, 1
        %s1360 = smul.addr %s1359, 32
        %s1361 = scalar_lea.vmem [#allocation8], %s1360
        // Predicated region
        $region49: #{tpu_custom_call.1} parent=35 // pred_check
          %p1362 = pneg %p129
        $region50: #{tpu_custom_call.1} parent=35 // pred_check_branch
          %1364 = sbr.rel (%p1362) target = $region52
        $region51: #{tpu_custom_call.1} parent=35 // pred_region
          %s1366 = ssub.s32 512, 512
          %1367 = vsyncadd %s1358, %s1366
          %s1368 = smul.addr %s22, 4
          %s1369 = smul.addr %s1368, 128
          %s1370 = scalar_lea.hbm %s4, %s1369
          %s1372 = sshll.u32 %s1361, 4
          %s1373 = int_to_ptr.vmem [resolvable:$true] %s1372
          %1375 = dma.vmem_to_hbm [thread:$0]  %s1373, 512, %s1370, %s1358
        $region52: #{tpu_custom_call.1} parent=35 // pred_fallthru
          _
      $region36: #{tpu_custom_call.1} parent=5 // pred_fallthru
        _
      %p1376 = scmp.le.s32.totalorder 2, %s17
      // Predicated region
      $region53: #{tpu_custom_call.1} parent=5 // pred_check
        %p1377 = pneg %p1376
      $region54: #{tpu_custom_call.1} parent=5 // pred_check_branch
        %1379 = sbr.rel (%p1377) target = $region56
      $region55: #{tpu_custom_call.1} parent=5 // pred_region
        %s1380 = ssub.s32 %s17, 2
        // Predicated region
        $region57: #{tpu_custom_call.1} parent=55 // pred_check
          %p1381 = pneg %p135
        $region58: #{tpu_custom_call.1} parent=55 // pred_check_branch
          %1383 = sbr.rel (%p1381) target = $region60
        $region59: #{tpu_custom_call.1} parent=55 // pred_region
          %s1384 = sand.u32 %s120, 1
          %s1385 = scalar_lea.sflag [#allocation4], %s1384
          %s1386 = sand.u32 %s120, 1
          %s1387 = smul.addr %s1386, 32
          %s1388 = scalar_lea.vmem [#allocation8], %s1387
          %1389 = dma.done %s1385, 512
        $region60: #{tpu_custom_call.1} parent=55 // pred_fallthru
          _
      $region56: #{tpu_custom_call.1} parent=5 // pred_fallthru
        _
    $region6: #{tpu_custom_call.1} parent=1 // loop_footer
      %s21 = sadd.s32 1, %s17
    $region7: #{tpu_custom_call.1} parent=1 // loop_footer_branch
      %16 = sbr.rel target = $region3
    $region8: #{tpu_custom_call.1} parent=1 // loop_exit
      _
    %1390 = vsyncpa [#allocation3], 1
    %s1391 = scalar_lea.sflag [#allocation3], 1
    %1392 = vsyncpa %s1391, 1
    %1393 = vsyncpa [#allocation6], 1
    %1394 = vsyncpa [#allocation4], 1
    %s1395 = scalar_lea.sflag [#allocation4], 1
    %1396 = vsyncpa %s1395, 1

</llo_original>
